<compile_context>
chip_gen: v7x
topology: tpu7x:2x2x1
jax: 0.10.0
libtpu: 0.0.40
codegen_flags: <defaults>
</compile_context>

<pallas_src>
import functools
import math

import jax
import jax.numpy as jnp
import numpy as np
from jax.experimental import pallas as pl
from jax.experimental.pallas import tpu as pltpu

EPS = 1e-5


def _round_up(x, m):
    return (x + m - 1) // m * m


# ---------------------------------------------------------------------------
# fused kernel: conv3+IN+ReLU -> conv3+IN -> (+skip) -> ReLU, one batch / step
# ---------------------------------------------------------------------------
def _fused_kernel(x_ref, m_ref, w1_ref, w2_ref, *rest,
                  D, H, W, cin, cout, Kp1, Kp2, PL, proj):
    if proj:
        wskip_ref, o_ref, xe_ref, p_ref = rest
    else:
        o_ref, xe_ref, p_ref = rest

    HW = H * W
    S = D * HW

    # One-time init: scratch persists across grid steps. The halo columns of
    # xe_ref must stay zero (never written afterwards) and the pad rows of
    # p_ref only need to stay finite (weight K-pad columns are zero), while
    # the interiors are fully overwritten every step -> zero only once.
    @pl.when(pl.program_id(0) == 0)
    def _():
        xe_ref[...] = jnp.zeros(xe_ref.shape, xe_ref.dtype)
        p_ref[...] = jnp.zeros(p_ref.shape, p_ref.dtype)

    # hoist the 9 (dh, dw) mask rows (loaded once, reused by both stages)
    mrows = [m_ref[i:i + 1, :] for i in range(9)]

    taps = [(dd, dh, dw)
            for dd in (-1, 0, 1) for dh in (-1, 0, 1) for dw in (-1, 0, 1)]

    def build_patches(src2d, C):
        # interior write; PL is a multiple of 128 -> lane-aligned store
        xe_ref[0:C, PL:PL + S] = src2d
        # group consecutive taps so each patch store covers whole 8-sublane
        # groups (C=4 -> pairs of taps -> unmasked (8, S) stores).
        group = 8 // math.gcd(8, C)
        t = 0
        while t < 27:
            g = min(group, 27 - t)
            pieces = []
            for j in range(g):
                dd, dh, dw = taps[t + j]
                off = dd * HW + dh * W + dw
                win = xe_ref[0:C, PL + off:PL + off + S]        # (C, S)
                if dh == 0 and dw == 0:
                    pieces.append(win)          # all-ones mask: skip the mul
                else:
                    mi = (dh + 1) * 3 + (dw + 1)
                    pieces.append(win * mrows[mi])
            blk = pieces[0] if g == 1 else jnp.concatenate(pieces, axis=0)
            p_ref[t * C:(t + g) * C, :] = blk.astype(p_ref.dtype)
            t += g

    def inorm(a):  # (C, S): two-pass (robust) per-row normalization over S
        mean = jnp.mean(a, axis=1, keepdims=True)
        xc = a - mean
        var = jnp.mean(xc * xc, axis=1, keepdims=True)
        return xc * jax.lax.rsqrt(var + EPS)

    x2d = x_ref[0]                                               # (cin, S)

    # ---- stage 1: conv3x3x3 (single im2col matmul) + InstanceNorm + ReLU ----
    build_patches(x2d, cin)
    a1 = jnp.dot(w1_ref[...], p_ref[0:Kp1, :],
                 preferred_element_type=jnp.float32)             # (cout, S)
    y1 = jnp.maximum(inorm(a1), 0.0)

    # ---- stage 2: conv3x3x3 + InstanceNorm (scratch reused; stage-1 dead) ----
    build_patches(y1, cout)
    a2 = jnp.dot(w2_ref[...], p_ref[0:Kp2, :],
                 preferred_element_type=jnp.float32)             # (cout, S)
    out = inorm(a2)

    # ---- skip path ----
    if proj:
        skip = inorm(jnp.dot(wskip_ref[...], x2d,
                             preferred_element_type=jnp.float32))
    else:
        skip = x2d                                               # cin == cout

    o_ref[0] = jnp.maximum(out + skip, 0.0)                      # lane-dense


# ---------------------------------------------------------------------------
# wrapper
# ---------------------------------------------------------------------------
@functools.partial(jax.jit, static_argnames=("stride", "matmul_dtype"))
def channel_compression_forward(x_ncdhw, w1, w2, w_skip=None, *, stride=1,
                                matmul_dtype=jnp.float32):
    """x_ncdhw: (N, Cin, D, H, W) f32.  w1: (Cout, Cin, 3,3,3),
    w2: (Cout, Cout, 3,3,3), w_skip: (Cout, Cin, 1,1,1) or None.
    Returns (N, Cout, D, H, W) f32."""
    assert stride == 1, "stride != 1 not supported (see TODO above)"
    N, cin, D, H, W = x_ncdhw.shape
    cout = w1.shape[0]
    S = D * H * W
    P0 = H * W + W + 1                # logical halo needed on each side
    PL = _round_up(P0, 128)           # lane-aligned halo actually allocated

    K1, K2 = 27 * cin, 27 * cout
    Kp1 = _round_up(K1, 128)
    Kp2 = _round_up(K2, 128)
    Kpmax = max(Kp1, Kp2)
    Cmax = max(cin, cout)

    # NCDHW -> (N, C, S): free reshape, channels on sublanes, S on lanes.
    x2 = x_ncdhw.reshape(N, cin, S).astype(jnp.float32)

    # (dh, dw) boundary-validity masks, precomputed once (constant under jit).
    s = np.arange(S)
    wpos = s % W
    hpos = (s // W) % H
    masks_np = np.zeros((9, S), np.float32)
    for dh in (-1, 0, 1):
        for dw in (-1, 0, 1):
            ok = ((hpos + dh >= 0) & (hpos + dh < H)
                  & (wpos + dw >= 0) & (wpos + dw < W))
            masks_np[(dh + 1) * 3 + (dw + 1)] = ok.astype(np.float32)
    masks = jnp.asarray(masks_np)

    # Weights: (Cout, Cin, kd, kh, kw) -> (Cout, kd, kh, kw, Cin) -> (Cout, K),
    # zero-padded on K to the lane-aligned Kp (pad rows of the patch matrix
    # therefore never contribute, whatever finite values they hold).
    def pack_w(w, C, Kp):
        K = 27 * C
        wp = jnp.transpose(w, (0, 2, 3, 4, 1)).reshape(cout, K).astype(jnp.float32)
        wp = jnp.pad(wp, ((0, 0), (0, Kp - K)))
        return wp.astype(matmul_dtype)

    w1p = pack_w(w1, cin, Kp1)
    w2p = pack_w(w2, cout, Kp2)

    in_specs = [
        pl.BlockSpec((1, cin, S), lambda n: (n, 0, 0)),
        pl.BlockSpec((9, S), lambda n: (0, 0)),
        pl.BlockSpec((cout, Kp1), lambda n: (0, 0)),
        pl.BlockSpec((cout, Kp2), lambda n: (0, 0)),
    ]
    args = [x2, masks, w1p, w2p]
    proj = w_skip is not None
    if proj:
        wskip2d = w_skip.reshape(cout, cin).astype(jnp.float32)
        in_specs.append(pl.BlockSpec((cout, cin), lambda n: (0, 0)))
        args.append(wskip2d)

    scratch_shapes = [
        pltpu.VMEM((Cmax, S + 2 * PL), jnp.float32),   # shared extended buffer
        pltpu.VMEM((Kpmax, S), matmul_dtype),          # shared im2col patches
    ]

    # Shape-adaptive VMEM budget (generation dependent): scale with scratch +
    # double-buffered IO, clamp to [32 MiB, 96 MiB]. On v7x prefer keeping
    # slabs small (scratch is already aliased) over raising this.
    itemsize = jnp.dtype(matmul_dtype).itemsize
    scratch_bytes = Cmax * (S + 2 * PL) * 4 + Kpmax * S * itemsize
    io_bytes = ((cin + cout) * S * 4 * 2 + 9 * S * 4
                + cout * (Kp1 + Kp2) * itemsize + cout * cin * 4)
    vmem_limit = int(min(96 * 2**20, max(32 * 2**20,
                                         4 * (scratch_bytes + io_bytes))))

    out = pl.pallas_call(
        functools.partial(_fused_kernel, D=D, H=H, W=W, cin=cin, cout=cout,
                          Kp1=Kp1, Kp2=Kp2, PL=PL, proj=proj),
        out_shape=jax.ShapeDtypeStruct((N, cout, S), jnp.float32),
        grid=(N,),
        in_specs=in_specs,
        out_specs=pl.BlockSpec((1, cout, S), lambda n: (n, 0, 0)),
        scratch_shapes=scratch_shapes,
        compiler_params=pltpu.CompilerParams(
            dimension_semantics=("parallel",),
            vmem_limit_bytes=vmem_limit),
    )(*args)

    return out.reshape(N, cout, D, H, W)


# ---------------------------------------------------------------------------
# pure-JAX reference (for correctness check only)
# ---------------------------------------------------------------------------
def _ref_forward(x, w1, w2, w_skip):
    def conv3(x, w):
        return jax.lax.conv_general_dilated(
            x, w, window_strides=(1, 1, 1),
            padding=((1, 1), (1, 1), (1, 1)),
            dimension_numbers=("NCDHW", "OIDHW", "NCDHW"))

    def inorm(t):
        mean = t.mean(axis=(2, 3, 4), keepdims=True)
        var = ((t - mean) ** 2).mean(axis=(2, 3, 4), keepdims=True)
        return (t - mean) / jnp.sqrt(var + EPS)

    y = jax.nn.relu(inorm(conv3(x, w1)))
    y = inorm(conv3(y, w2))
    if w_skip is None:
        s = x
    else:
        s = inorm(jax.lax.conv_general_dilated(
            x, w_skip, window_strides=(1, 1, 1), padding="VALID",
            dimension_numbers=("NCDHW", "OIDHW", "NCDHW")))
    return jax.nn.relu(y + s)


# ---------------------------------------------------------------------------
if __name__ == "__main__":
    N, D, H, W = 2, 4, 8, 8

    def run_case(cin, cout, key):
        k_x, k_w1, k_w2, k_ws = jax.random.split(key, 4)
        x = jax.random.normal(k_x, (N, cin, D, H, W), jnp.float32)
        w1 = jax.random.normal(k_w1, (cout, cin, 3, 3, 3), jnp.float32) * 0.1
        w2 = jax.random.normal(k_w2, (cout, cout, 3, 3, 3), jnp.float32) * 0.1
        if cin != cout:
            w_skip = jax.random.normal(k_ws, (cout, cin, 1, 1, 1),
                                       jnp.float32) * 0.1
        else:
            w_skip = None
        out = channel_compression_forward(x, w1, w2, w_skip, stride=1)
        out = jax.block_until_ready(out)
        ref = jax.block_until_ready(_ref_forward(x, w1, w2, w_skip))
        np.testing.assert_allclose(np.asarray(out), np.asarray(ref),
                                   atol=1e-4, rtol=1e-4)
        return out

    key = jax.random.PRNGKey(0)
    k1, k2 = jax.random.split(key)
    run_case(cin=4, cout=8, key=k1)   # projected (conv1x1 + IN) skip path
    run_case(cin=4, cout=4, key=k2)   # identity skip path
    print("KERNEL_OK")
</pallas_src>

<mosaic_0001>
module attributes {stable_mosaic.version = 11 : i64} {
  func.func @_fused_kernel(%arg0: i32, %arg1: memref<1x4x256xf32, #tpu.memory_space<vmem>>, %arg2: memref<9x256xf32, #tpu.memory_space<vmem>>, %arg3: memref<8x128xf32, #tpu.memory_space<vmem>>, %arg4: memref<8x256xf32, #tpu.memory_space<vmem>>, %arg5: memref<8x4xf32, #tpu.memory_space<vmem>>, %arg6: memref<1x8x256xf32, #tpu.memory_space<vmem>>, %arg7: memref<8x512xf32, #tpu.memory_space<vmem>>, %arg8: memref<256x256xf32, #tpu.memory_space<vmem>>) attributes {dimension_semantics = [#tpu.dimension_semantics<parallel>], iteration_bounds = array<i64: 2>, scalar_prefetch = 0 : i64, scratch_operands = 2 : i64, tpu.core_type = #tpu.core_type<tc>, window_params = [{transform_indices = @transform_0, window_bounds = array<i64: 1, 4, 256>}, {pipeline_mode = #tpu.pipeline_mode<synchronous>, transform_indices = @transform_1, window_bounds = array<i64: 9, 256>}, {pipeline_mode = #tpu.pipeline_mode<synchronous>, transform_indices = @transform_2, window_bounds = array<i64: 8, 128>}, {pipeline_mode = #tpu.pipeline_mode<synchronous>, transform_indices = @transform_3, window_bounds = array<i64: 8, 256>}, {pipeline_mode = #tpu.pipeline_mode<synchronous>, transform_indices = @transform_4, window_bounds = array<i64: 8, 4>}, {transform_indices = @transform_5, window_bounds = array<i64: 1, 8, 256>}]} {
    %c0_i32 = arith.constant 0 : i32
    %0 = arith.cmpi eq, %arg0, %c0_i32 : i32
    %1 = arith.extui %0 : i1 to i32
    %c0_i32_0 = arith.constant 0 : i32
    %2 = arith.cmpi ne, %1, %c0_i32_0 : i32
    scf.if %2 {
      %cst_195 = arith.constant 0.000000e+00 : f32
      %283 = vector.broadcast %cst_195 : f32 to vector<8x512xf32>
      %c0_196 = arith.constant 0 : index
      %c0_197 = arith.constant 0 : index
      %284 = vector.load %arg7[%c0_196, %c0_197] : memref<8x512xf32, #tpu.memory_space<vmem>>, vector<8x512xf32>
      tpu.vector_store %arg7[%c0_196, %c0_197], %283 {strides = array<i32>} : memref<8x512xf32, #tpu.memory_space<vmem>>, vector<8x512xf32>,
      %cst_198 = arith.constant 0.000000e+00 : f32
      %285 = vector.broadcast %cst_198 : f32 to vector<256x256xf32>
      %c0_199 = arith.constant 0 : index
      %c0_200 = arith.constant 0 : index
      %286 = vector.load %arg8[%c0_199, %c0_200] : memref<256x256xf32, #tpu.memory_space<vmem>>, vector<256x256xf32>
      tpu.vector_store %arg8[%c0_199, %c0_200], %285 {strides = array<i32>} : memref<256x256xf32, #tpu.memory_space<vmem>>, vector<256x256xf32>,
    } else {
    }
    %c0 = arith.constant 0 : index
    %c0_1 = arith.constant 0 : index
    %3 = vector.load %arg2[%c0, %c0_1] : memref<9x256xf32, #tpu.memory_space<vmem>>, vector<1x256xf32>
    %c1 = arith.constant 1 : index
    %c0_2 = arith.constant 0 : index
    %4 = vector.load %arg2[%c1, %c0_2] : memref<9x256xf32, #tpu.memory_space<vmem>>, vector<1x256xf32>
    %c2 = arith.constant 2 : index
    %c0_3 = arith.constant 0 : index
    %5 = vector.load %arg2[%c2, %c0_3] : memref<9x256xf32, #tpu.memory_space<vmem>>, vector<1x256xf32>
    %c3 = arith.constant 3 : index
    %c0_4 = arith.constant 0 : index
    %6 = vector.load %arg2[%c3, %c0_4] : memref<9x256xf32, #tpu.memory_space<vmem>>, vector<1x256xf32>
    %c5 = arith.constant 5 : index
    %c0_5 = arith.constant 0 : index
    %7 = vector.load %arg2[%c5, %c0_5] : memref<9x256xf32, #tpu.memory_space<vmem>>, vector<1x256xf32>
    %c6 = arith.constant 6 : index
    %c0_6 = arith.constant 0 : index
    %8 = vector.load %arg2[%c6, %c0_6] : memref<9x256xf32, #tpu.memory_space<vmem>>, vector<1x256xf32>
    %c7 = arith.constant 7 : index
    %c0_7 = arith.constant 0 : index
    %9 = vector.load %arg2[%c7, %c0_7] : memref<9x256xf32, #tpu.memory_space<vmem>>, vector<1x256xf32>
    %c8 = arith.constant 8 : index
    %c0_8 = arith.constant 0 : index
    %10 = vector.load %arg2[%c8, %c0_8] : memref<9x256xf32, #tpu.memory_space<vmem>>, vector<1x256xf32>
    %c0_9 = arith.constant 0 : index
    %c0_10 = arith.constant 0 : index
    %c0_11 = arith.constant 0 : index
    %11 = vector.load %arg1[%c0_9, %c0_10, %c0_11] : memref<1x4x256xf32, #tpu.memory_space<vmem>>, vector<1x4x256xf32>
    %12 = vector.shape_cast %11 : vector<1x4x256xf32> to vector<4x256xf32>
    %c0_12 = arith.constant 0 : index
    %c128 = arith.constant 128 : index
    %13 = vector.load %arg7[%c0_12, %c128] : memref<8x512xf32, #tpu.memory_space<vmem>>, vector<4x256xf32>
    tpu.vector_store %arg7[%c0_12, %c128], %12 {strides = array<i32>} : memref<8x512xf32, #tpu.memory_space<vmem>>, vector<4x256xf32>,
    %c0_13 = arith.constant 0 : index
    %c55 = arith.constant 55 : index
    %14 = vector.load %arg7[%c0_13, %c55] : memref<8x512xf32, #tpu.memory_space<vmem>>, vector<4x256xf32>
    %15 = vector.broadcast %3 : vector<1x256xf32> to vector<4x256xf32>
    %16 = arith.mulf %14, %15 : vector<4x256xf32>
    %c0_14 = arith.constant 0 : index
    %c56 = arith.constant 56 : index
    %17 = vector.load %arg7[%c0_14, %c56] : memref<8x512xf32, #tpu.memory_space<vmem>>, vector<4x256xf32>
    %18 = vector.broadcast %4 : vector<1x256xf32> to vector<4x256xf32>
    %19 = arith.mulf %17, %18 : vector<4x256xf32>
    %20 = tpu.concatenate %16, %19 in 0 : vector<4x256xf32>, vector<4x256xf32> -> vector<8x256xf32>
    %c0_15 = arith.constant 0 : index
    %c0_16 = arith.constant 0 : index
    %21 = vector.load %arg8[%c0_15, %c0_16] : memref<256x256xf32, #tpu.memory_space<vmem>>, vector<8x256xf32>
    tpu.vector_store %arg8[%c0_15, %c0_16], %20 {strides = array<i32>} : memref<256x256xf32, #tpu.memory_space<vmem>>, vector<8x256xf32>,
    %c0_17 = arith.constant 0 : index
    %c57 = arith.constant 57 : index
    %22 = vector.load %arg7[%c0_17, %c57] : memref<8x512xf32, #tpu.memory_space<vmem>>, vector<4x256xf32>
    %23 = vector.broadcast %5 : vector<1x256xf32> to vector<4x256xf32>
    %24 = arith.mulf %22, %23 : vector<4x256xf32>
    %c0_18 = arith.constant 0 : index
    %c63 = arith.constant 63 : index
    %25 = vector.load %arg7[%c0_18, %c63] : memref<8x512xf32, #tpu.memory_space<vmem>>, vector<4x256xf32>
    %26 = vector.broadcast %6 : vector<1x256xf32> to vector<4x256xf32>
    %27 = arith.mulf %25, %26 : vector<4x256xf32>
    %28 = tpu.concatenate %24, %27 in 0 : vector<4x256xf32>, vector<4x256xf32> -> vector<8x256xf32>
    %c8_19 = arith.constant 8 : index
    %c0_20 = arith.constant 0 : index
    %29 = vector.load %arg8[%c8_19, %c0_20] : memref<256x256xf32, #tpu.memory_space<vmem>>, vector<8x256xf32>
    tpu.vector_store %arg8[%c8_19, %c0_20], %28 {strides = array<i32>} : memref<256x256xf32, #tpu.memory_space<vmem>>, vector<8x256xf32>,
    %c0_21 = arith.constant 0 : index
    %c64 = arith.constant 64 : index
    %30 = vector.load %arg7[%c0_21, %c64] : memref<8x512xf32, #tpu.memory_space<vmem>>, vector<4x256xf32>
    %c0_22 = arith.constant 0 : index
    %c65 = arith.constant 65 : index
    %31 = vector.load %arg7[%c0_22, %c65] : memref<8x512xf32, #tpu.memory_space<vmem>>, vector<4x256xf32>
    %32 = vector.broadcast %7 : vector<1x256xf32> to vector<4x256xf32>
    %33 = arith.mulf %31, %32 : vector<4x256xf32>
    %34 = tpu.concatenate %30, %33 in 0 : vector<4x256xf32>, vector<4x256xf32> -> vector<8x256xf32>
    %c16 = arith.constant 16 : index
    %c0_23 = arith.constant 0 : index
    %35 = vector.load %arg8[%c16, %c0_23] : memref<256x256xf32, #tpu.memory_space<vmem>>, vector<8x256xf32>
    tpu.vector_store %arg8[%c16, %c0_23], %34 {strides = array<i32>} : memref<256x256xf32, #tpu.memory_space<vmem>>, vector<8x256xf32>,
    %c0_24 = arith.constant 0 : index
    %c71 = arith.constant 71 : index
    %36 = vector.load %arg7[%c0_24, %c71] : memref<8x512xf32, #tpu.memory_space<vmem>>, vector<4x256xf32>
    %37 = vector.broadcast %8 : vector<1x256xf32> to vector<4x256xf32>
    %38 = arith.mulf %36, %37 : vector<4x256xf32>
    %c0_25 = arith.constant 0 : index
    %c72 = arith.constant 72 : index
    %39 = vector.load %arg7[%c0_25, %c72] : memref<8x512xf32, #tpu.memory_space<vmem>>, vector<4x256xf32>
    %40 = vector.broadcast %9 : vector<1x256xf32> to vector<4x256xf32>
    %41 = arith.mulf %39, %40 : vector<4x256xf32>
    %42 = tpu.concatenate %38, %41 in 0 : vector<4x256xf32>, vector<4x256xf32> -> vector<8x256xf32>
    %c24 = arith.constant 24 : index
    %c0_26 = arith.constant 0 : index
    %43 = vector.load %arg8[%c24, %c0_26] : memref<256x256xf32, #tpu.memory_space<vmem>>, vector<8x256xf32>
    tpu.vector_store %arg8[%c24, %c0_26], %42 {strides = array<i32>} : memref<256x256xf32, #tpu.memory_space<vmem>>, vector<8x256xf32>,
    %c0_27 = arith.constant 0 : index
    %c73 = arith.constant 73 : index
    %44 = vector.load %arg7[%c0_27, %c73] : memref<8x512xf32, #tpu.memory_space<vmem>>, vector<4x256xf32>
    %45 = vector.broadcast %10 : vector<1x256xf32> to vector<4x256xf32>
    %46 = arith.mulf %44, %45 : vector<4x256xf32>
    %c0_28 = arith.constant 0 : index
    %c119 = arith.constant 119 : index
    %47 = vector.load %arg7[%c0_28, %c119] : memref<8x512xf32, #tpu.memory_space<vmem>>, vector<4x256xf32>
    %48 = vector.broadcast %3 : vector<1x256xf32> to vector<4x256xf32>
    %49 = arith.mulf %47, %48 : vector<4x256xf32>
    %50 = tpu.concatenate %46, %49 in 0 : vector<4x256xf32>, vector<4x256xf32> -> vector<8x256xf32>
    %c32 = arith.constant 32 : index
    %c0_29 = arith.constant 0 : index
    %51 = vector.load %arg8[%c32, %c0_29] : memref<256x256xf32, #tpu.memory_space<vmem>>, vector<8x256xf32>
    tpu.vector_store %arg8[%c32, %c0_29], %50 {strides = array<i32>} : memref<256x256xf32, #tpu.memory_space<vmem>>, vector<8x256xf32>,
    %c0_30 = arith.constant 0 : index
    %c120 = arith.constant 120 : index
    %52 = vector.load %arg7[%c0_30, %c120] : memref<8x512xf32, #tpu.memory_space<vmem>>, vector<4x256xf32>
    %53 = vector.broadcast %4 : vector<1x256xf32> to vector<4x256xf32>
    %54 = arith.mulf %52, %53 : vector<4x256xf32>
    %c0_31 = arith.constant 0 : index
    %c121 = arith.constant 121 : index
    %55 = vector.load %arg7[%c0_31, %c121] : memref<8x512xf32, #tpu.memory_space<vmem>>, vector<4x256xf32>
    %56 = vector.broadcast %5 : vector<1x256xf32> to vector<4x256xf32>
    %57 = arith.mulf %55, %56 : vector<4x256xf32>
    %58 = tpu.concatenate %54, %57 in 0 : vector<4x256xf32>, vector<4x256xf32> -> vector<8x256xf32>
    %c40 = arith.constant 40 : index
    %c0_32 = arith.constant 0 : index
    %59 = vector.load %arg8[%c40, %c0_32] : memref<256x256xf32, #tpu.memory_space<vmem>>, vector<8x256xf32>
    tpu.vector_store %arg8[%c40, %c0_32], %58 {strides = array<i32>} : memref<256x256xf32, #tpu.memory_space<vmem>>, vector<8x256xf32>,
    %c0_33 = arith.constant 0 : index
    %c127 = arith.constant 127 : index
    %60 = vector.load %arg7[%c0_33, %c127] : memref<8x512xf32, #tpu.memory_space<vmem>>, vector<4x256xf32>
    %61 = vector.broadcast %6 : vector<1x256xf32> to vector<4x256xf32>
    %62 = arith.mulf %60, %61 : vector<4x256xf32>
    %c0_34 = arith.constant 0 : index
    %c128_35 = arith.constant 128 : index
    %63 = vector.load %arg7[%c0_34, %c128_35] : memref<8x512xf32, #tpu.memory_space<vmem>>, vector<4x256xf32>
    %64 = tpu.concatenate %62, %63 in 0 : vector<4x256xf32>, vector<4x256xf32> -> vector<8x256xf32>
    %c48 = arith.constant 48 : index
    %c0_36 = arith.constant 0 : index
    %65 = vector.load %arg8[%c48, %c0_36] : memref<256x256xf32, #tpu.memory_space<vmem>>, vector<8x256xf32>
    tpu.vector_store %arg8[%c48, %c0_36], %64 {strides = array<i32>} : memref<256x256xf32, #tpu.memory_space<vmem>>, vector<8x256xf32>,
    %c0_37 = arith.constant 0 : index
    %c129 = arith.constant 129 : index
    %66 = vector.load %arg7[%c0_37, %c129] : memref<8x512xf32, #tpu.memory_space<vmem>>, vector<4x256xf32>
    %67 = vector.broadcast %7 : vector<1x256xf32> to vector<4x256xf32>
    %68 = arith.mulf %66, %67 : vector<4x256xf32>
    %c0_38 = arith.constant 0 : index
    %c135 = arith.constant 135 : index
    %69 = vector.load %arg7[%c0_38, %c135] : memref<8x512xf32, #tpu.memory_space<vmem>>, vector<4x256xf32>
    %70 = vector.broadcast %8 : vector<1x256xf32> to vector<4x256xf32>
    %71 = arith.mulf %69, %70 : vector<4x256xf32>
    %72 = tpu.concatenate %68, %71 in 0 : vector<4x256xf32>, vector<4x256xf32> -> vector<8x256xf32>
    %c56_39 = arith.constant 56 : index
    %c0_40 = arith.constant 0 : index
    %73 = vector.load %arg8[%c56_39, %c0_40] : memref<256x256xf32, #tpu.memory_space<vmem>>, vector<8x256xf32>
    tpu.vector_store %arg8[%c56_39, %c0_40], %72 {strides = array<i32>} : memref<256x256xf32, #tpu.memory_space<vmem>>, vector<8x256xf32>,
    %c0_41 = arith.constant 0 : index
    %c136 = arith.constant 136 : index
    %74 = vector.load %arg7[%c0_41, %c136] : memref<8x512xf32, #tpu.memory_space<vmem>>, vector<4x256xf32>
    %75 = vector.broadcast %9 : vector<1x256xf32> to vector<4x256xf32>
    %76 = arith.mulf %74, %75 : vector<4x256xf32>
    %c0_42 = arith.constant 0 : index
    %c137 = arith.constant 137 : index
    %77 = vector.load %arg7[%c0_42, %c137] : memref<8x512xf32, #tpu.memory_space<vmem>>, vector<4x256xf32>
    %78 = vector.broadcast %10 : vector<1x256xf32> to vector<4x256xf32>
    %79 = arith.mulf %77, %78 : vector<4x256xf32>
    %80 = tpu.concatenate %76, %79 in 0 : vector<4x256xf32>, vector<4x256xf32> -> vector<8x256xf32>
    %c64_43 = arith.constant 64 : index
    %c0_44 = arith.constant 0 : index
    %81 = vector.load %arg8[%c64_43, %c0_44] : memref<256x256xf32, #tpu.memory_space<vmem>>, vector<8x256xf32>
    tpu.vector_store %arg8[%c64_43, %c0_44], %80 {strides = array<i32>} : memref<256x256xf32, #tpu.memory_space<vmem>>, vector<8x256xf32>,
    %c0_45 = arith.constant 0 : index
    %c183 = arith.constant 183 : index
    %82 = vector.load %arg7[%c0_45, %c183] : memref<8x512xf32, #tpu.memory_space<vmem>>, vector<4x256xf32>
    %83 = vector.broadcast %3 : vector<1x256xf32> to vector<4x256xf32>
    %84 = arith.mulf %82, %83 : vector<4x256xf32>
    %c0_46 = arith.constant 0 : index
    %c184 = arith.constant 184 : index
    %85 = vector.load %arg7[%c0_46, %c184] : memref<8x512xf32, #tpu.memory_space<vmem>>, vector<4x256xf32>
    %86 = vector.broadcast %4 : vector<1x256xf32> to vector<4x256xf32>
    %87 = arith.mulf %85, %86 : vector<4x256xf32>
    %88 = tpu.concatenate %84, %87 in 0 : vector<4x256xf32>, vector<4x256xf32> -> vector<8x256xf32>
    %c72_47 = arith.constant 72 : index
    %c0_48 = arith.constant 0 : index
    %89 = vector.load %arg8[%c72_47, %c0_48] : memref<256x256xf32, #tpu.memory_space<vmem>>, vector<8x256xf32>
    tpu.vector_store %arg8[%c72_47, %c0_48], %88 {strides = array<i32>} : memref<256x256xf32, #tpu.memory_space<vmem>>, vector<8x256xf32>,
    %c0_49 = arith.constant 0 : index
    %c185 = arith.constant 185 : index
    %90 = vector.load %arg7[%c0_49, %c185] : memref<8x512xf32, #tpu.memory_space<vmem>>, vector<4x256xf32>
    %91 = vector.broadcast %5 : vector<1x256xf32> to vector<4x256xf32>
    %92 = arith.mulf %90, %91 : vector<4x256xf32>
    %c0_50 = arith.constant 0 : index
    %c191 = arith.constant 191 : index
    %93 = vector.load %arg7[%c0_50, %c191] : memref<8x512xf32, #tpu.memory_space<vmem>>, vector<4x256xf32>
    %94 = vector.broadcast %6 : vector<1x256xf32> to vector<4x256xf32>
    %95 = arith.mulf %93, %94 : vector<4x256xf32>
    %96 = tpu.concatenate %92, %95 in 0 : vector<4x256xf32>, vector<4x256xf32> -> vector<8x256xf32>
    %c80 = arith.constant 80 : index
    %c0_51 = arith.constant 0 : index
    %97 = vector.load %arg8[%c80, %c0_51] : memref<256x256xf32, #tpu.memory_space<vmem>>, vector<8x256xf32>
    tpu.vector_store %arg8[%c80, %c0_51], %96 {strides = array<i32>} : memref<256x256xf32, #tpu.memory_space<vmem>>, vector<8x256xf32>,
    %c0_52 = arith.constant 0 : index
    %c192 = arith.constant 192 : index
    %98 = vector.load %arg7[%c0_52, %c192] : memref<8x512xf32, #tpu.memory_space<vmem>>, vector<4x256xf32>
    %c0_53 = arith.constant 0 : index
    %c193 = arith.constant 193 : index
    %99 = vector.load %arg7[%c0_53, %c193] : memref<8x512xf32, #tpu.memory_space<vmem>>, vector<4x256xf32>
    %100 = vector.broadcast %7 : vector<1x256xf32> to vector<4x256xf32>
    %101 = arith.mulf %99, %100 : vector<4x256xf32>
    %102 = tpu.concatenate %98, %101 in 0 : vector<4x256xf32>, vector<4x256xf32> -> vector<8x256xf32>
    %c88 = arith.constant 88 : index
    %c0_54 = arith.constant 0 : index
    %103 = vector.load %arg8[%c88, %c0_54] : memref<256x256xf32, #tpu.memory_space<vmem>>, vector<8x256xf32>
    tpu.vector_store %arg8[%c88, %c0_54], %102 {strides = array<i32>} : memref<256x256xf32, #tpu.memory_space<vmem>>, vector<8x256xf32>,
    %c0_55 = arith.constant 0 : index
    %c199 = arith.constant 199 : index
    %104 = vector.load %arg7[%c0_55, %c199] : memref<8x512xf32, #tpu.memory_space<vmem>>, vector<4x256xf32>
    %105 = vector.broadcast %8 : vector<1x256xf32> to vector<4x256xf32>
    %106 = arith.mulf %104, %105 : vector<4x256xf32>
    %c0_56 = arith.constant 0 : index
    %c200 = arith.constant 200 : index
    %107 = vector.load %arg7[%c0_56, %c200] : memref<8x512xf32, #tpu.memory_space<vmem>>, vector<4x256xf32>
    %108 = vector.broadcast %9 : vector<1x256xf32> to vector<4x256xf32>
    %109 = arith.mulf %107, %108 : vector<4x256xf32>
    %110 = tpu.concatenate %106, %109 in 0 : vector<4x256xf32>, vector<4x256xf32> -> vector<8x256xf32>
    %c96 = arith.constant 96 : index
    %c0_57 = arith.constant 0 : index
    %111 = vector.load %arg8[%c96, %c0_57] : memref<256x256xf32, #tpu.memory_space<vmem>>, vector<8x256xf32>
    tpu.vector_store %arg8[%c96, %c0_57], %110 {strides = array<i32>} : memref<256x256xf32, #tpu.memory_space<vmem>>, vector<8x256xf32>,
    %c0_58 = arith.constant 0 : index
    %c201 = arith.constant 201 : index
    %112 = vector.load %arg7[%c0_58, %c201] : memref<8x512xf32, #tpu.memory_space<vmem>>, vector<4x256xf32>
    %113 = vector.broadcast %10 : vector<1x256xf32> to vector<4x256xf32>
    %114 = arith.mulf %112, %113 : vector<4x256xf32>
    %c104 = arith.constant 104 : index
    %c0_59 = arith.constant 0 : index
    %115 = vector.load %arg8[%c104, %c0_59] : memref<256x256xf32, #tpu.memory_space<vmem>>, vector<4x256xf32>
    tpu.vector_store %arg8[%c104, %c0_59], %114 {strides = array<i32>} : memref<256x256xf32, #tpu.memory_space<vmem>>, vector<4x256xf32>,
    %c0_60 = arith.constant 0 : index
    %c0_61 = arith.constant 0 : index
    %116 = vector.load %arg3[%c0_60, %c0_61] : memref<8x128xf32, #tpu.memory_space<vmem>>, vector<8x128xf32>
    %c0_62 = arith.constant 0 : index
    %c0_63 = arith.constant 0 : index
    %117 = vector.load %arg8[%c0_62, %c0_63] : memref<256x256xf32, #tpu.memory_space<vmem>>, vector<128x256xf32>
    %cst = arith.constant dense<0.000000e+00> : vector<8x256xf32>
    %118 = tpu.matmul %116, %117, %cst {dimension_numbers = #tpu.dot_dimension_numbers<[1], [0], [0], [1], [0, 0, 1, 1], [], []>} : vector<8x128xf32>, vector<128x256xf32>, vector<8x256xf32> -> vector<8x256xf32>
    %cst_64 = arith.constant dense<0.000000e+00> : vector<8xf32>
    %119 = vector.multi_reduction <add>, %118, %cst_64 [1] : vector<8x256xf32> to vector<8xf32>
    %120 = vector.shape_cast %119 : vector<8xf32> to vector<8x1xf32>
    %cst_65 = arith.constant 2.560000e+02 : f32
    %121 = vector.broadcast %cst_65 : f32 to vector<8x1xf32>
    %122 = arith.divf %120, %121 : vector<8x1xf32>
    %123 = vector.broadcast %122 : vector<8x1xf32> to vector<8x256xf32>
    %124 = arith.subf %118, %123 : vector<8x256xf32>
    %125 = arith.mulf %124, %124 : vector<8x256xf32>
    %cst_66 = arith.constant dense<0.000000e+00> : vector<8xf32>
    %126 = vector.multi_reduction <add>, %125, %cst_66 [1] : vector<8x256xf32> to vector<8xf32>
    %127 = vector.shape_cast %126 : vector<8xf32> to vector<8x1xf32>
    %cst_67 = arith.constant 2.560000e+02 : f32
    %128 = vector.broadcast %cst_67 : f32 to vector<8x1xf32>
    %129 = arith.divf %127, %128 : vector<8x1xf32>
    %cst_68 = arith.constant 9.99999974E-6 : f32
    %130 = vector.broadcast %cst_68 : f32 to vector<8x1xf32>
    %131 = arith.addf %129, %130 : vector<8x1xf32>
    %132 = math.rsqrt %131 : vector<8x1xf32>
    %133 = vector.broadcast %132 : vector<8x1xf32> to vector<8x256xf32>
    %134 = arith.mulf %124, %133 : vector<8x256xf32>
    %cst_69 = arith.constant 0.000000e+00 : f32
    %135 = vector.broadcast %cst_69 : f32 to vector<8x256xf32>
    %136 = arith.maximumf %134, %135 : vector<8x256xf32>
    %c0_70 = arith.constant 0 : index
    %c128_71 = arith.constant 128 : index
    %137 = vector.load %arg7[%c0_70, %c128_71] : memref<8x512xf32, #tpu.memory_space<vmem>>, vector<8x256xf32>
    tpu.vector_store %arg7[%c0_70, %c128_71], %136 {strides = array<i32>} : memref<8x512xf32, #tpu.memory_space<vmem>>, vector<8x256xf32>,
    %c0_72 = arith.constant 0 : index
    %c55_73 = arith.constant 55 : index
    %138 = vector.load %arg7[%c0_72, %c55_73] : memref<8x512xf32, #tpu.memory_space<vmem>>, vector<8x256xf32>
    %139 = vector.broadcast %3 : vector<1x256xf32> to vector<8x256xf32>
    %140 = arith.mulf %138, %139 : vector<8x256xf32>
    %c0_74 = arith.constant 0 : index
    %c0_75 = arith.constant 0 : index
    %141 = vector.load %arg8[%c0_74, %c0_75] : memref<256x256xf32, #tpu.memory_space<vmem>>, vector<8x256xf32>
    tpu.vector_store %arg8[%c0_74, %c0_75], %140 {strides = array<i32>} : memref<256x256xf32, #tpu.memory_space<vmem>>, vector<8x256xf32>,
    %c0_76 = arith.constant 0 : index
    %c56_77 = arith.constant 56 : index
    %142 = vector.load %arg7[%c0_76, %c56_77] : memref<8x512xf32, #tpu.memory_space<vmem>>, vector<8x256xf32>
    %143 = vector.broadcast %4 : vector<1x256xf32> to vector<8x256xf32>
    %144 = arith.mulf %142, %143 : vector<8x256xf32>
    %c8_78 = arith.constant 8 : index
    %c0_79 = arith.constant 0 : index
    %145 = vector.load %arg8[%c8_78, %c0_79] : memref<256x256xf32, #tpu.memory_space<vmem>>, vector<8x256xf32>
    tpu.vector_store %arg8[%c8_78, %c0_79], %144 {strides = array<i32>} : memref<256x256xf32, #tpu.memory_space<vmem>>, vector<8x256xf32>,
    %c0_80 = arith.constant 0 : index
    %c57_81 = arith.constant 57 : index
    %146 = vector.load %arg7[%c0_80, %c57_81] : memref<8x512xf32, #tpu.memory_space<vmem>>, vector<8x256xf32>
    %147 = vector.broadcast %5 : vector<1x256xf32> to vector<8x256xf32>
    %148 = arith.mulf %146, %147 : vector<8x256xf32>
    %c16_82 = arith.constant 16 : index
    %c0_83 = arith.constant 0 : index
    %149 = vector.load %arg8[%c16_82, %c0_83] : memref<256x256xf32, #tpu.memory_space<vmem>>, vector<8x256xf32>
    tpu.vector_store %arg8[%c16_82, %c0_83], %148 {strides = array<i32>} : memref<256x256xf32, #tpu.memory_space<vmem>>, vector<8x256xf32>,
    %c0_84 = arith.constant 0 : index
    %c63_85 = arith.constant 63 : index
    %150 = vector.load %arg7[%c0_84, %c63_85] : memref<8x512xf32, #tpu.memory_space<vmem>>, vector<8x256xf32>
    %151 = vector.broadcast %6 : vector<1x256xf32> to vector<8x256xf32>
    %152 = arith.mulf %150, %151 : vector<8x256xf32>
    %c24_86 = arith.constant 24 : index
    %c0_87 = arith.constant 0 : index
    %153 = vector.load %arg8[%c24_86, %c0_87] : memref<256x256xf32, #tpu.memory_space<vmem>>, vector<8x256xf32>
    tpu.vector_store %arg8[%c24_86, %c0_87], %152 {strides = array<i32>} : memref<256x256xf32, #tpu.memory_space<vmem>>, vector<8x256xf32>,
    %c0_88 = arith.constant 0 : index
    %c64_89 = arith.constant 64 : index
    %154 = vector.load %arg7[%c0_88, %c64_89] : memref<8x512xf32, #tpu.memory_space<vmem>>, vector<8x256xf32>
    %c32_90 = arith.constant 32 : index
    %c0_91 = arith.constant 0 : index
    %155 = vector.load %arg8[%c32_90, %c0_91] : memref<256x256xf32, #tpu.memory_space<vmem>>, vector<8x256xf32>
    tpu.vector_store %arg8[%c32_90, %c0_91], %154 {strides = array<i32>} : memref<256x256xf32, #tpu.memory_space<vmem>>, vector<8x256xf32>,
    %c0_92 = arith.constant 0 : index
    %c65_93 = arith.constant 65 : index
    %156 = vector.load %arg7[%c0_92, %c65_93] : memref<8x512xf32, #tpu.memory_space<vmem>>, vector<8x256xf32>
    %157 = vector.broadcast %7 : vector<1x256xf32> to vector<8x256xf32>
    %158 = arith.mulf %156, %157 : vector<8x256xf32>
    %c40_94 = arith.constant 40 : index
    %c0_95 = arith.constant 0 : index
    %159 = vector.load %arg8[%c40_94, %c0_95] : memref<256x256xf32, #tpu.memory_space<vmem>>, vector<8x256xf32>
    tpu.vector_store %arg8[%c40_94, %c0_95], %158 {strides = array<i32>} : memref<256x256xf32, #tpu.memory_space<vmem>>, vector<8x256xf32>,
    %c0_96 = arith.constant 0 : index
    %c71_97 = arith.constant 71 : index
    %160 = vector.load %arg7[%c0_96, %c71_97] : memref<8x512xf32, #tpu.memory_space<vmem>>, vector<8x256xf32>
    %161 = vector.broadcast %8 : vector<1x256xf32> to vector<8x256xf32>
    %162 = arith.mulf %160, %161 : vector<8x256xf32>
    %c48_98 = arith.constant 48 : index
    %c0_99 = arith.constant 0 : index
    %163 = vector.load %arg8[%c48_98, %c0_99] : memref<256x256xf32, #tpu.memory_space<vmem>>, vector<8x256xf32>
    tpu.vector_store %arg8[%c48_98, %c0_99], %162 {strides = array<i32>} : memref<256x256xf32, #tpu.memory_space<vmem>>, vector<8x256xf32>,
    %c0_100 = arith.constant 0 : index
    %c72_101 = arith.constant 72 : index
    %164 = vector.load %arg7[%c0_100, %c72_101] : memref<8x512xf32, #tpu.memory_space<vmem>>, vector<8x256xf32>
    %165 = vector.broadcast %9 : vector<1x256xf32> to vector<8x256xf32>
    %166 = arith.mulf %164, %165 : vector<8x256xf32>
    %c56_102 = arith.constant 56 : index
    %c0_103 = arith.constant 0 : index
    %167 = vector.load %arg8[%c56_102, %c0_103] : memref<256x256xf32, #tpu.memory_space<vmem>>, vector<8x256xf32>
    tpu.vector_store %arg8[%c56_102, %c0_103], %166 {strides = array<i32>} : memref<256x256xf32, #tpu.memory_space<vmem>>, vector<8x256xf32>,
    %c0_104 = arith.constant 0 : index
    %c73_105 = arith.constant 73 : index
    %168 = vector.load %arg7[%c0_104, %c73_105] : memref<8x512xf32, #tpu.memory_space<vmem>>, vector<8x256xf32>
    %169 = vector.broadcast %10 : vector<1x256xf32> to vector<8x256xf32>
    %170 = arith.mulf %168, %169 : vector<8x256xf32>
    %c64_106 = arith.constant 64 : index
    %c0_107 = arith.constant 0 : index
    %171 = vector.load %arg8[%c64_106, %c0_107] : memref<256x256xf32, #tpu.memory_space<vmem>>, vector<8x256xf32>
    tpu.vector_store %arg8[%c64_106, %c0_107], %170 {strides = array<i32>} : memref<256x256xf32, #tpu.memory_space<vmem>>, vector<8x256xf32>,
    %c0_108 = arith.constant 0 : index
    %c119_109 = arith.constant 119 : index
    %172 = vector.load %arg7[%c0_108, %c119_109] : memref<8x512xf32, #tpu.memory_space<vmem>>, vector<8x256xf32>
    %173 = vector.broadcast %3 : vector<1x256xf32> to vector<8x256xf32>
    %174 = arith.mulf %172, %173 : vector<8x256xf32>
    %c72_110 = arith.constant 72 : index
    %c0_111 = arith.constant 0 : index
    %175 = vector.load %arg8[%c72_110, %c0_111] : memref<256x256xf32, #tpu.memory_space<vmem>>, vector<8x256xf32>
    tpu.vector_store %arg8[%c72_110, %c0_111], %174 {strides = array<i32>} : memref<256x256xf32, #tpu.memory_space<vmem>>, vector<8x256xf32>,
    %c0_112 = arith.constant 0 : index
    %c120_113 = arith.constant 120 : index
    %176 = vector.load %arg7[%c0_112, %c120_113] : memref<8x512xf32, #tpu.memory_space<vmem>>, vector<8x256xf32>
    %177 = vector.broadcast %4 : vector<1x256xf32> to vector<8x256xf32>
    %178 = arith.mulf %176, %177 : vector<8x256xf32>
    %c80_114 = arith.constant 80 : index
    %c0_115 = arith.constant 0 : index
    %179 = vector.load %arg8[%c80_114, %c0_115] : memref<256x256xf32, #tpu.memory_space<vmem>>, vector<8x256xf32>
    tpu.vector_store %arg8[%c80_114, %c0_115], %178 {strides = array<i32>} : memref<256x256xf32, #tpu.memory_space<vmem>>, vector<8x256xf32>,
    %c0_116 = arith.constant 0 : index
    %c121_117 = arith.constant 121 : index
    %180 = vector.load %arg7[%c0_116, %c121_117] : memref<8x512xf32, #tpu.memory_space<vmem>>, vector<8x256xf32>
    %181 = vector.broadcast %5 : vector<1x256xf32> to vector<8x256xf32>
    %182 = arith.mulf %180, %181 : vector<8x256xf32>
    %c88_118 = arith.constant 88 : index
    %c0_119 = arith.constant 0 : index
    %183 = vector.load %arg8[%c88_118, %c0_119] : memref<256x256xf32, #tpu.memory_space<vmem>>, vector<8x256xf32>
    tpu.vector_store %arg8[%c88_118, %c0_119], %182 {strides = array<i32>} : memref<256x256xf32, #tpu.memory_space<vmem>>, vector<8x256xf32>,
    %c0_120 = arith.constant 0 : index
    %c127_121 = arith.constant 127 : index
    %184 = vector.load %arg7[%c0_120, %c127_121] : memref<8x512xf32, #tpu.memory_space<vmem>>, vector<8x256xf32>
    %185 = vector.broadcast %6 : vector<1x256xf32> to vector<8x256xf32>
    %186 = arith.mulf %184, %185 : vector<8x256xf32>
    %c96_122 = arith.constant 96 : index
    %c0_123 = arith.constant 0 : index
    %187 = vector.load %arg8[%c96_122, %c0_123] : memref<256x256xf32, #tpu.memory_space<vmem>>, vector<8x256xf32>
    tpu.vector_store %arg8[%c96_122, %c0_123], %186 {strides = array<i32>} : memref<256x256xf32, #tpu.memory_space<vmem>>, vector<8x256xf32>,
    %c0_124 = arith.constant 0 : index
    %c128_125 = arith.constant 128 : index
    %188 = vector.load %arg7[%c0_124, %c128_125] : memref<8x512xf32, #tpu.memory_space<vmem>>, vector<8x256xf32>
    %c104_126 = arith.constant 104 : index
    %c0_127 = arith.constant 0 : index
    %189 = vector.load %arg8[%c104_126, %c0_127] : memref<256x256xf32, #tpu.memory_space<vmem>>, vector<8x256xf32>
    tpu.vector_store %arg8[%c104_126, %c0_127], %188 {strides = array<i32>} : memref<256x256xf32, #tpu.memory_space<vmem>>, vector<8x256xf32>,
    %c0_128 = arith.constant 0 : index
    %c129_129 = arith.constant 129 : index
    %190 = vector.load %arg7[%c0_128, %c129_129] : memref<8x512xf32, #tpu.memory_space<vmem>>, vector<8x256xf32>
    %191 = vector.broadcast %7 : vector<1x256xf32> to vector<8x256xf32>
    %192 = arith.mulf %190, %191 : vector<8x256xf32>
    %c112 = arith.constant 112 : index
    %c0_130 = arith.constant 0 : index
    %193 = vector.load %arg8[%c112, %c0_130] : memref<256x256xf32, #tpu.memory_space<vmem>>, vector<8x256xf32>
    tpu.vector_store %arg8[%c112, %c0_130], %192 {strides = array<i32>} : memref<256x256xf32, #tpu.memory_space<vmem>>, vector<8x256xf32>,
    %c0_131 = arith.constant 0 : index
    %c135_132 = arith.constant 135 : index
    %194 = vector.load %arg7[%c0_131, %c135_132] : memref<8x512xf32, #tpu.memory_space<vmem>>, vector<8x256xf32>
    %195 = vector.broadcast %8 : vector<1x256xf32> to vector<8x256xf32>
    %196 = arith.mulf %194, %195 : vector<8x256xf32>
    %c120_133 = arith.constant 120 : index
    %c0_134 = arith.constant 0 : index
    %197 = vector.load %arg8[%c120_133, %c0_134] : memref<256x256xf32, #tpu.memory_space<vmem>>, vector<8x256xf32>
    tpu.vector_store %arg8[%c120_133, %c0_134], %196 {strides = array<i32>} : memref<256x256xf32, #tpu.memory_space<vmem>>, vector<8x256xf32>,
    %c0_135 = arith.constant 0 : index
    %c136_136 = arith.constant 136 : index
    %198 = vector.load %arg7[%c0_135, %c136_136] : memref<8x512xf32, #tpu.memory_space<vmem>>, vector<8x256xf32>
    %199 = vector.broadcast %9 : vector<1x256xf32> to vector<8x256xf32>
    %200 = arith.mulf %198, %199 : vector<8x256xf32>
    %c128_137 = arith.constant 128 : index
    %c0_138 = arith.constant 0 : index
    %201 = vector.load %arg8[%c128_137, %c0_138] : memref<256x256xf32, #tpu.memory_space<vmem>>, vector<8x256xf32>
    tpu.vector_store %arg8[%c128_137, %c0_138], %200 {strides = array<i32>} : memref<256x256xf32, #tpu.memory_space<vmem>>, vector<8x256xf32>,
    %c0_139 = arith.constant 0 : index
    %c137_140 = arith.constant 137 : index
    %202 = vector.load %arg7[%c0_139, %c137_140] : memref<8x512xf32, #tpu.memory_space<vmem>>, vector<8x256xf32>
    %203 = vector.broadcast %10 : vector<1x256xf32> to vector<8x256xf32>
    %204 = arith.mulf %202, %203 : vector<8x256xf32>
    %c136_141 = arith.constant 136 : index
    %c0_142 = arith.constant 0 : index
    %205 = vector.load %arg8[%c136_141, %c0_142] : memref<256x256xf32, #tpu.memory_space<vmem>>, vector<8x256xf32>
    tpu.vector_store %arg8[%c136_141, %c0_142], %204 {strides = array<i32>} : memref<256x256xf32, #tpu.memory_space<vmem>>, vector<8x256xf32>,
    %c0_143 = arith.constant 0 : index
    %c183_144 = arith.constant 183 : index
    %206 = vector.load %arg7[%c0_143, %c183_144] : memref<8x512xf32, #tpu.memory_space<vmem>>, vector<8x256xf32>
    %207 = vector.broadcast %3 : vector<1x256xf32> to vector<8x256xf32>
    %208 = arith.mulf %206, %207 : vector<8x256xf32>
    %c144 = arith.constant 144 : index
    %c0_145 = arith.constant 0 : index
    %209 = vector.load %arg8[%c144, %c0_145] : memref<256x256xf32, #tpu.memory_space<vmem>>, vector<8x256xf32>
    tpu.vector_store %arg8[%c144, %c0_145], %208 {strides = array<i32>} : memref<256x256xf32, #tpu.memory_space<vmem>>, vector<8x256xf32>,
    %c0_146 = arith.constant 0 : index
    %c184_147 = arith.constant 184 : index
    %210 = vector.load %arg7[%c0_146, %c184_147] : memref<8x512xf32, #tpu.memory_space<vmem>>, vector<8x256xf32>
    %211 = vector.broadcast %4 : vector<1x256xf32> to vector<8x256xf32>
    %212 = arith.mulf %210, %211 : vector<8x256xf32>
    %c152 = arith.constant 152 : index
    %c0_148 = arith.constant 0 : index
    %213 = vector.load %arg8[%c152, %c0_148] : memref<256x256xf32, #tpu.memory_space<vmem>>, vector<8x256xf32>
    tpu.vector_store %arg8[%c152, %c0_148], %212 {strides = array<i32>} : memref<256x256xf32, #tpu.memory_space<vmem>>, vector<8x256xf32>,
    %c0_149 = arith.constant 0 : index
    %c185_150 = arith.constant 185 : index
    %214 = vector.load %arg7[%c0_149, %c185_150] : memref<8x512xf32, #tpu.memory_space<vmem>>, vector<8x256xf32>
    %215 = vector.broadcast %5 : vector<1x256xf32> to vector<8x256xf32>
    %216 = arith.mulf %214, %215 : vector<8x256xf32>
    %c160 = arith.constant 160 : index
    %c0_151 = arith.constant 0 : index
    %217 = vector.load %arg8[%c160, %c0_151] : memref<256x256xf32, #tpu.memory_space<vmem>>, vector<8x256xf32>
    tpu.vector_store %arg8[%c160, %c0_151], %216 {strides = array<i32>} : memref<256x256xf32, #tpu.memory_space<vmem>>, vector<8x256xf32>,
    %c0_152 = arith.constant 0 : index
    %c191_153 = arith.constant 191 : index
    %218 = vector.load %arg7[%c0_152, %c191_153] : memref<8x512xf32, #tpu.memory_space<vmem>>, vector<8x256xf32>
    %219 = vector.broadcast %6 : vector<1x256xf32> to vector<8x256xf32>
    %220 = arith.mulf %218, %219 : vector<8x256xf32>
    %c168 = arith.constant 168 : index
    %c0_154 = arith.constant 0 : index
    %221 = vector.load %arg8[%c168, %c0_154] : memref<256x256xf32, #tpu.memory_space<vmem>>, vector<8x256xf32>
    tpu.vector_store %arg8[%c168, %c0_154], %220 {strides = array<i32>} : memref<256x256xf32, #tpu.memory_space<vmem>>, vector<8x256xf32>,
    %c0_155 = arith.constant 0 : index
    %c192_156 = arith.constant 192 : index
    %222 = vector.load %arg7[%c0_155, %c192_156] : memref<8x512xf32, #tpu.memory_space<vmem>>, vector<8x256xf32>
    %c176 = arith.constant 176 : index
    %c0_157 = arith.constant 0 : index
    %223 = vector.load %arg8[%c176, %c0_157] : memref<256x256xf32, #tpu.memory_space<vmem>>, vector<8x256xf32>
    tpu.vector_store %arg8[%c176, %c0_157], %222 {strides = array<i32>} : memref<256x256xf32, #tpu.memory_space<vmem>>, vector<8x256xf32>,
    %c0_158 = arith.constant 0 : index
    %c193_159 = arith.constant 193 : index
    %224 = vector.load %arg7[%c0_158, %c193_159] : memref<8x512xf32, #tpu.memory_space<vmem>>, vector<8x256xf32>
    %225 = vector.broadcast %7 : vector<1x256xf32> to vector<8x256xf32>
    %226 = arith.mulf %224, %225 : vector<8x256xf32>
    %c184_160 = arith.constant 184 : index
    %c0_161 = arith.constant 0 : index
    %227 = vector.load %arg8[%c184_160, %c0_161] : memref<256x256xf32, #tpu.memory_space<vmem>>, vector<8x256xf32>
    tpu.vector_store %arg8[%c184_160, %c0_161], %226 {strides = array<i32>} : memref<256x256xf32, #tpu.memory_space<vmem>>, vector<8x256xf32>,
    %c0_162 = arith.constant 0 : index
    %c199_163 = arith.constant 199 : index
    %228 = vector.load %arg7[%c0_162, %c199_163] : memref<8x512xf32, #tpu.memory_space<vmem>>, vector<8x256xf32>
    %229 = vector.broadcast %8 : vector<1x256xf32> to vector<8x256xf32>
    %230 = arith.mulf %228, %229 : vector<8x256xf32>
    %c192_164 = arith.constant 192 : index
    %c0_165 = arith.constant 0 : index
    %231 = vector.load %arg8[%c192_164, %c0_165] : memref<256x256xf32, #tpu.memory_space<vmem>>, vector<8x256xf32>
    tpu.vector_store %arg8[%c192_164, %c0_165], %230 {strides = array<i32>} : memref<256x256xf32, #tpu.memory_space<vmem>>, vector<8x256xf32>,
    %c0_166 = arith.constant 0 : index
    %c200_167 = arith.constant 200 : index
    %232 = vector.load %arg7[%c0_166, %c200_167] : memref<8x512xf32, #tpu.memory_space<vmem>>, vector<8x256xf32>
    %233 = vector.broadcast %9 : vector<1x256xf32> to vector<8x256xf32>
    %234 = arith.mulf %232, %233 : vector<8x256xf32>
    %c200_168 = arith.constant 200 : index
    %c0_169 = arith.constant 0 : index
    %235 = vector.load %arg8[%c200_168, %c0_169] : memref<256x256xf32, #tpu.memory_space<vmem>>, vector<8x256xf32>
    tpu.vector_store %arg8[%c200_168, %c0_169], %234 {strides = array<i32>} : memref<256x256xf32, #tpu.memory_space<vmem>>, vector<8x256xf32>,
    %c0_170 = arith.constant 0 : index
    %c201_171 = arith.constant 201 : index
    %236 = vector.load %arg7[%c0_170, %c201_171] : memref<8x512xf32, #tpu.memory_space<vmem>>, vector<8x256xf32>
    %237 = vector.broadcast %10 : vector<1x256xf32> to vector<8x256xf32>
    %238 = arith.mulf %236, %237 : vector<8x256xf32>
    %c208 = arith.constant 208 : index
    %c0_172 = arith.constant 0 : index
    %239 = vector.load %arg8[%c208, %c0_172] : memref<256x256xf32, #tpu.memory_space<vmem>>, vector<8x256xf32>
    tpu.vector_store %arg8[%c208, %c0_172], %238 {strides = array<i32>} : memref<256x256xf32, #tpu.memory_space<vmem>>, vector<8x256xf32>,
    %c0_173 = arith.constant 0 : index
    %c0_174 = arith.constant 0 : index
    %240 = vector.load %arg4[%c0_173, %c0_174] : memref<8x256xf32, #tpu.memory_space<vmem>>, vector<8x256xf32>
    %c0_175 = arith.constant 0 : index
    %c0_176 = arith.constant 0 : index
    %241 = vector.load %arg8[%c0_175, %c0_176] : memref<256x256xf32, #tpu.memory_space<vmem>>, vector<256x256xf32>
    %cst_177 = arith.constant dense<0.000000e+00> : vector<8x256xf32>
    %242 = tpu.matmul %240, %241, %cst_177 {dimension_numbers = #tpu.dot_dimension_numbers<[1], [0], [0], [1], [0, 0, 1, 1], [], []>} : vector<8x256xf32>, vector<256x256xf32>, vector<8x256xf32> -> vector<8x256xf32>
    %cst_178 = arith.constant dense<0.000000e+00> : vector<8xf32>
    %243 = vector.multi_reduction <add>, %242, %cst_178 [1] : vector<8x256xf32> to vector<8xf32>
    %244 = vector.shape_cast %243 : vector<8xf32> to vector<8x1xf32>
    %cst_179 = arith.constant 2.560000e+02 : f32
    %245 = vector.broadcast %cst_179 : f32 to vector<8x1xf32>
    %246 = arith.divf %244, %245 : vector<8x1xf32>
    %247 = vector.broadcast %246 : vector<8x1xf32> to vector<8x256xf32>
    %248 = arith.subf %242, %247 : vector<8x256xf32>
    %249 = arith.mulf %248, %248 : vector<8x256xf32>
    %cst_180 = arith.constant dense<0.000000e+00> : vector<8xf32>
    %250 = vector.multi_reduction <add>, %249, %cst_180 [1] : vector<8x256xf32> to vector<8xf32>
    %251 = vector.shape_cast %250 : vector<8xf32> to vector<8x1xf32>
    %cst_181 = arith.constant 2.560000e+02 : f32
    %252 = vector.broadcast %cst_181 : f32 to vector<8x1xf32>
    %253 = arith.divf %251, %252 : vector<8x1xf32>
    %cst_182 = arith.constant 9.99999974E-6 : f32
    %254 = vector.broadcast %cst_182 : f32 to vector<8x1xf32>
    %255 = arith.addf %253, %254 : vector<8x1xf32>
    %256 = math.rsqrt %255 : vector<8x1xf32>
    %257 = vector.broadcast %256 : vector<8x1xf32> to vector<8x256xf32>
    %258 = arith.mulf %248, %257 : vector<8x256xf32>
    %c0_183 = arith.constant 0 : index
    %c0_184 = arith.constant 0 : index
    %259 = vector.load %arg5[%c0_183, %c0_184] : memref<8x4xf32, #tpu.memory_space<vmem>>, vector<8x4xf32>
    %cst_185 = arith.constant dense<0.000000e+00> : vector<8x256xf32>
    %260 = tpu.matmul %259, %12, %cst_185 {dimension_numbers = #tpu.dot_dimension_numbers<[1], [0], [0], [1], [0, 0, 1, 1], [], []>} : vector<8x4xf32>, vector<4x256xf32>, vector<8x256xf32> -> vector<8x256xf32>
    %cst_186 = arith.constant dense<0.000000e+00> : vector<8xf32>
    %261 = vector.multi_reduction <add>, %260, %cst_186 [1] : vector<8x256xf32> to vector<8xf32>
    %262 = vector.shape_cast %261 : vector<8xf32> to vector<8x1xf32>
    %cst_187 = arith.constant 2.560000e+02 : f32
    %263 = vector.broadcast %cst_187 : f32 to vector<8x1xf32>
    %264 = arith.divf %262, %263 : vector<8x1xf32>
    %265 = vector.broadcast %264 : vector<8x1xf32> to vector<8x256xf32>
    %266 = arith.subf %260, %265 : vector<8x256xf32>
    %267 = arith.mulf %266, %266 : vector<8x256xf32>
    %cst_188 = arith.constant dense<0.000000e+00> : vector<8xf32>
    %268 = vector.multi_reduction <add>, %267, %cst_188 [1] : vector<8x256xf32> to vector<8xf32>
    %269 = vector.shape_cast %268 : vector<8xf32> to vector<8x1xf32>
    %cst_189 = arith.constant 2.560000e+02 : f32
    %270 = vector.broadcast %cst_189 : f32 to vector<8x1xf32>
    %271 = arith.divf %269, %270 : vector<8x1xf32>
    %cst_190 = arith.constant 9.99999974E-6 : f32
    %272 = vector.broadcast %cst_190 : f32 to vector<8x1xf32>
    %273 = arith.addf %271, %272 : vector<8x1xf32>
    %274 = math.rsqrt %273 : vector<8x1xf32>
    %275 = vector.broadcast %274 : vector<8x1xf32> to vector<8x256xf32>
    %276 = arith.mulf %266, %275 : vector<8x256xf32>
    %277 = arith.addf %258, %276 : vector<8x256xf32>
    %cst_191 = arith.constant 0.000000e+00 : f32
    %278 = vector.broadcast %cst_191 : f32 to vector<8x256xf32>
    %279 = arith.maximumf %277, %278 : vector<8x256xf32>
    %c0_192 = arith.constant 0 : index
    %c0_193 = arith.constant 0 : index
    %c0_194 = arith.constant 0 : index
    %280 = vector.load %arg6[%c0_192, %c0_193, %c0_194] : memref<1x8x256xf32, #tpu.memory_space<vmem>>, vector<1x8x256xf32>
    %281 = vector.shape_cast %280 : vector<1x8x256xf32> to vector<8x256xf32>
    %282 = vector.shape_cast %279 : vector<8x256xf32> to vector<1x8x256xf32>
    tpu.vector_store %arg6[%c0_192, %c0_193, %c0_194], %282 {strides = array<i32>} : memref<1x8x256xf32, #tpu.memory_space<vmem>>, vector<1x8x256xf32>,
    return
  }
  func.func @transform_0(%arg0: i32) -> (i32, i32, i32) {
    %c0_i32 = arith.constant 0 : i32
    %c0_i32_0 = arith.constant 0 : i32
    %c0_i32_1 = arith.constant 0 : i32
    return %arg0, %c0_i32, %c0_i32_0 : i32, i32, i32
  }
  func.func @transform_1(%arg0: i32) -> (i32, i32) {
    %c0_i32 = arith.constant 0 : i32
    %c0_i32_0 = arith.constant 0 : i32
    %c0_i32_1 = arith.constant 0 : i32
    return %c0_i32, %c0_i32_0 : i32, i32
  }
  func.func @transform_2(%arg0: i32) -> (i32, i32) {
    %c0_i32 = arith.constant 0 : i32
    %c0_i32_0 = arith.constant 0 : i32
    %c0_i32_1 = arith.constant 0 : i32
    return %c0_i32, %c0_i32_0 : i32, i32
  }
  func.func @transform_3(%arg0: i32) -> (i32, i32) {
    %c0_i32 = arith.constant 0 : i32
    %c0_i32_0 = arith.constant 0 : i32
    %c0_i32_1 = arith.constant 0 : i32
    return %c0_i32, %c0_i32_0 : i32, i32
  }
  func.func @transform_4(%arg0: i32) -> (i32, i32) {
    %c0_i32 = arith.constant 0 : i32
    %c0_i32_0 = arith.constant 0 : i32
    %c0_i32_1 = arith.constant 0 : i32
    return %c0_i32, %c0_i32_0 : i32, i32
  }
  func.func @transform_5(%arg0: i32) -> (i32, i32, i32) {
    %c0_i32 = arith.constant 0 : i32
    %c0_i32_0 = arith.constant 0 : i32
    %c0_i32_1 = arith.constant 0 : i32
    return %arg0, %c0_i32, %c0_i32_0 : i32, i32, i32
  }
}

</mosaic_0001>

<llo_original>
// kernel: channel_compression_forward.1
$region0: #{channel_compression_forward.1}
  #allocation0 [shape = 'u32[]', space=smem, size = 0x4, offset = 0x4, fixed_abs, tag = 'smem constant byte address 0x4 - core index']
  #allocation1 [shape = 'u32[144,128]{1,0:T(1,128)}', space=vmem, size = 0x12000, scoped, tag = 'internal scratch']
  #allocation2 [shape = 'f32[8,512]{1,0:T(8,128)}', space=vmem, size = 0x4000, scoped, tag = 'scratch operand']
  #allocation3 [shape = 'f32[256,256]{1,0:T(8,128)}', space=vmem, size = 0x40000, scoped, tag = 'scratch operand']
  %s0 = inlined_call_operand.vmem [shape: f32[2,4,256], index: 0, kind: input, shape index: {}]
  %s1 = inlined_call_operand.vmem [shape: f32[9,256], index: 1, kind: input, shape index: {}]
  %s2 = inlined_call_operand.vmem [shape: f32[8,128], index: 2, kind: input, shape index: {}]
  %s3 = inlined_call_operand.vmem [shape: f32[8,256], index: 3, kind: input, shape index: {}]
  %s4 = inlined_call_operand.vmem [shape: f32[8,4], index: 4, kind: input, shape index: {}]
  %s5 = inlined_call_operand.vmem [shape: f32[2,8,256], index: 5, kind: output, shape index: {}]
  %s6 = sld [smem:[#allocation0]]
  $region57: #{channel_compression_forward.1} parent=0
    _
  %s8 = ssub.s32 1, %s6
  %s9 = scalar_select 0, %s8, %s6
  loop: start=0, step=1, limit=4
  $region2: #{channel_compression_forward.1} parent=0 // loop_pre_header
    _
  $region3: #{channel_compression_forward.1} parent=0 // loop_header
    %s11 = sphi 0, %s15
    %p12 = scmp.ge.s32.totalorder %s11, 4
    %s21 = sphi 0, %s23
    %s24 = sphi 0, %s21
    %s25 = sphi 0, %s24
    %s41 = sphi 0, %s25
    %s45 = sphi 0, %s45
    %s47 = sphi 0, %s45
    %s48 = sphi 0, %s47
    %s62 = sphi 0, %s48
    %s66 = sphi 0, %s66
    %s68 = sphi 0, %s66
    %s69 = sphi 0, %s68
    %s83 = sphi 0, %s69
    %s87 = sphi 0, %s87
    %s89 = sphi 0, %s87
    %s90 = sphi 0, %s89
    %s104 = sphi 0, %s90
    %s108 = sphi 0, %s108
    %s110 = sphi 0, %s108
    %s111 = sphi 0, %s110
    %s125 = sphi 0, %s111
    %s131 = sphi 0, %s133
    %s134 = sphi 0, %s131
    %s135 = sphi 0, %s134
    %s151 = sphi 0, %s135
  $region4: #{channel_compression_forward.1} parent=0 // loop_header_branch
    %14 = sbr.rel (%p12) target = $region8
  $region5: #{channel_compression_forward.1} parent=0 // loop_body
    %s16 = ssub.s32 %s11, 1
    %s17 = ssub.s32 %s11, 2
    %s18 = sadd.s32 %s11, 1
    %s19 = ssub.s32 %s11, %s18
    %p20 = scmp.eq.s32.totalorder %s19, 0
    %s22 = sadd.s32 %s21, 1
    %s23 = scalar_select %p20, %s21, %s22
    %p26 = pneg %p20
    %p27 = scmp.eq.s32.totalorder %s11, 1
    %p28 = por %p26, %p27
    %p29 = scmp.ne.s32.totalorder %s21, %s24
    %p30 = scmp.eq.s32.totalorder %s11, 0
    %p31 = por %p29, %p30
    %p32 = scmp.ne.s32.totalorder %s21, %s24
    %p33 = scmp.eq.s32.totalorder %s16, 1
    %p34 = por %p32, %p33
    %p35 = scmp.ne.s32.totalorder %s24, %s25
    %p36 = scmp.eq.s32.totalorder %s16, 0
    %p37 = por %p35, %p36
    %p38 = scmp.ne.s32.totalorder %s24, %s25
    %p39 = scmp.eq.s32.totalorder %s17, 1
    %p40 = por %p38, %p39
    %p42 = scmp.ne.s32.totalorder %s25, %s41
    %p43 = scmp.eq.s32.totalorder %s17, 0
    %p44 = por %p42, %p43
    %s46 = sadd.s32 %s45, 1
    %p49 = scmp.eq.s32.totalorder %s11, 1
    %p50 = scmp.ne.s32.totalorder %s45, %s47
    %p51 = scmp.eq.s32.totalorder %s11, 0
    %p52 = por %p50, %p51
    %p53 = scmp.ne.s32.totalorder %s45, %s47
    %p54 = scmp.eq.s32.totalorder %s16, 1
    %p55 = por %p53, %p54
    %p56 = scmp.ne.s32.totalorder %s47, %s48
    %p57 = scmp.eq.s32.totalorder %s16, 0
    %p58 = por %p56, %p57
    %p59 = scmp.ne.s32.totalorder %s47, %s48
    %p60 = scmp.eq.s32.totalorder %s17, 1
    %p61 = por %p59, %p60
    %p63 = scmp.ne.s32.totalorder %s48, %s62
    %p64 = scmp.eq.s32.totalorder %s17, 0
    %p65 = por %p63, %p64
    %s67 = sadd.s32 %s66, 1
    %p70 = scmp.eq.s32.totalorder %s11, 1
    %p71 = scmp.ne.s32.totalorder %s66, %s68
    %p72 = scmp.eq.s32.totalorder %s11, 0
    %p73 = por %p71, %p72
    %p74 = scmp.ne.s32.totalorder %s66, %s68
    %p75 = scmp.eq.s32.totalorder %s16, 1
    %p76 = por %p74, %p75
    %p77 = scmp.ne.s32.totalorder %s68, %s69
    %p78 = scmp.eq.s32.totalorder %s16, 0
    %p79 = por %p77, %p78
    %p80 = scmp.ne.s32.totalorder %s68, %s69
    %p81 = scmp.eq.s32.totalorder %s17, 1
    %p82 = por %p80, %p81
    %p84 = scmp.ne.s32.totalorder %s69, %s83
    %p85 = scmp.eq.s32.totalorder %s17, 0
    %p86 = por %p84, %p85
    %s88 = sadd.s32 %s87, 1
    %p91 = scmp.eq.s32.totalorder %s11, 1
    %p92 = scmp.ne.s32.totalorder %s87, %s89
    %p93 = scmp.eq.s32.totalorder %s11, 0
    %p94 = por %p92, %p93
    %p95 = scmp.ne.s32.totalorder %s87, %s89
    %p96 = scmp.eq.s32.totalorder %s16, 1
    %p97 = por %p95, %p96
    %p98 = scmp.ne.s32.totalorder %s89, %s90
    %p99 = scmp.eq.s32.totalorder %s16, 0
    %p100 = por %p98, %p99
    %p101 = scmp.ne.s32.totalorder %s89, %s90
    %p102 = scmp.eq.s32.totalorder %s17, 1
    %p103 = por %p101, %p102
    %p105 = scmp.ne.s32.totalorder %s90, %s104
    %p106 = scmp.eq.s32.totalorder %s17, 0
    %p107 = por %p105, %p106
    %s109 = sadd.s32 %s108, 1
    %p112 = scmp.eq.s32.totalorder %s11, 1
    %p113 = scmp.ne.s32.totalorder %s108, %s110
    %p114 = scmp.eq.s32.totalorder %s11, 0
    %p115 = por %p113, %p114
    %p116 = scmp.ne.s32.totalorder %s108, %s110
    %p117 = scmp.eq.s32.totalorder %s16, 1
    %p118 = por %p116, %p117
    %p119 = scmp.ne.s32.totalorder %s110, %s111
    %p120 = scmp.eq.s32.totalorder %s16, 0
    %p121 = por %p119, %p120
    %p122 = scmp.ne.s32.totalorder %s110, %s111
    %p123 = scmp.eq.s32.totalorder %s17, 1
    %p124 = por %p122, %p123
    %p126 = scmp.ne.s32.totalorder %s111, %s125
    %p127 = scmp.eq.s32.totalorder %s17, 0
    %p128 = por %p126, %p127
    %s129 = ssub.s32 %s11, %s18
    %p130 = scmp.eq.s32.totalorder %s129, 0
    %s132 = sadd.s32 %s131, 1
    %s133 = scalar_select %p130, %s131, %s132
    %p136 = pneg %p130
    %p137 = scmp.eq.s32.totalorder %s11, 1
    %p138 = por %p136, %p137
    %p139 = scmp.ne.s32.totalorder %s131, %s134
    %p140 = scmp.eq.s32.totalorder %s11, 0
    %p141 = por %p139, %p140
    %p142 = scmp.ne.s32.totalorder %s131, %s134
    %p143 = scmp.eq.s32.totalorder %s16, 1
    %p144 = por %p142, %p143
    %p145 = scmp.ne.s32.totalorder %s134, %s135
    %p146 = scmp.eq.s32.totalorder %s16, 0
    %p147 = por %p145, %p146
    %p148 = scmp.ne.s32.totalorder %s134, %s135
    %p149 = scmp.eq.s32.totalorder %s17, 1
    %p150 = por %p148, %p149
    %p152 = scmp.ne.s32.totalorder %s135, %s151
    %p153 = scmp.eq.s32.totalorder %s17, 0
    %p154 = por %p152, %p153
    %p155 = scmp.le.s32.totalorder 1, %s11
    %p156 = scmp.lt.s32.totalorder %s11, 3
    %p157 = pnand %p155, %p156
    %p158 = pneg %p157
    // Predicated region
    $region9: #{channel_compression_forward.1} parent=5 // pred_check
      _
    $region10: #{channel_compression_forward.1} parent=5 // pred_check_branch
      %160 = sbr.rel (%p157) target = $region12
    $region11: #{channel_compression_forward.1} parent=5 // pred_region
      %s161 = ssub.s32 %s11, 1
      // Predicated region
      $region13: #{channel_compression_forward.1} parent=11 // pred_check
        %p162 = pneg %p58
      $region14: #{channel_compression_forward.1} parent=11 // pred_check_branch
        %164 = sbr.rel (%p162) target = $region16
      $region15: #{channel_compression_forward.1} parent=11 // pred_region
        _
      $region16: #{channel_compression_forward.1} parent=11 // pred_fallthru
        _
      // Predicated region
      $region17: #{channel_compression_forward.1} parent=11 // pred_check
        %p165 = pneg %p79
      $region18: #{channel_compression_forward.1} parent=11 // pred_check_branch
        %167 = sbr.rel (%p165) target = $region20
      $region19: #{channel_compression_forward.1} parent=11 // pred_region
        _
      $region20: #{channel_compression_forward.1} parent=11 // pred_fallthru
        _
      // Predicated region
      $region21: #{channel_compression_forward.1} parent=11 // pred_check
        %p168 = pneg %p100
      $region22: #{channel_compression_forward.1} parent=11 // pred_check_branch
        %170 = sbr.rel (%p168) target = $region24
      $region23: #{channel_compression_forward.1} parent=11 // pred_region
        _
      $region24: #{channel_compression_forward.1} parent=11 // pred_fallthru
        _
      // Predicated region
      $region25: #{channel_compression_forward.1} parent=11 // pred_check
        %p171 = pneg %p121
      $region26: #{channel_compression_forward.1} parent=11 // pred_check_branch
        %173 = sbr.rel (%p171) target = $region28
      $region27: #{channel_compression_forward.1} parent=11 // pred_region
        _
      $region28: #{channel_compression_forward.1} parent=11 // pred_fallthru
        _
    $region12: #{channel_compression_forward.1} parent=5 // pred_fallthru
      _
    %p174 = scmp.lt.s32.totalorder %s11, 2
    // Predicated region
    $region29: #{channel_compression_forward.1} parent=5 // pred_check
      %p175 = pneg %p174
    $region30: #{channel_compression_forward.1} parent=5 // pred_check_branch
      %177 = sbr.rel (%p175) target = $region32
    $region31: #{channel_compression_forward.1} parent=5 // pred_region
      // Predicated region
      $region33: #{channel_compression_forward.1} parent=31 // pred_check
        %p178 = pneg %p31
      $region34: #{channel_compression_forward.1} parent=31 // pred_check_branch
        %180 = sbr.rel (%p178) target = $region36
      $region35: #{channel_compression_forward.1} parent=31 // pred_region
        %p181 = scmp.lt.s32.totalorder %s11, 1
        %s182 = scalar_select %p181, %s11, 1
        %s183 = smul.addr %s182, 2
        %s184 = smul.addr %s183, 4
        %s185 = scalar_lea.vmem %s0, %s184
      $region36: #{channel_compression_forward.1} parent=31 // pred_fallthru
        _
    $region32: #{channel_compression_forward.1} parent=5 // pred_fallthru
      _
    %p186 = scmp.le.s32.totalorder 1, %s11
    %p187 = scmp.lt.s32.totalorder %s11, 3
    %p188 = pnand %p186, %p187
    %p189 = pneg %p188
    // Predicated region
    $region37: #{channel_compression_forward.1} parent=5 // pred_check
      _
    $region38: #{channel_compression_forward.1} parent=5 // pred_check_branch
      %191 = sbr.rel (%p188) target = $region40
    $region39: #{channel_compression_forward.1} parent=5 // pred_region
      %s192 = ssub.s32 %s11, 1
      %p193 = scmp.lt.s32.totalorder %s16, 1
      %s194 = scalar_select %p193, %s16, 1
      %s195 = smul.addr %s194, 2
      %s196 = smul.addr %s195, 4
      %s197 = scalar_lea.vmem %s0, %s196
      %p198 = pneg %p37
      %p199 = pneg %p34
      %p200 = pneg %p58
      %p201 = pneg %p55
      %p202 = pneg %p79
      %p203 = pneg %p76
      %p204 = pneg %p100
      %p205 = pneg %p97
      %p206 = pneg %p121
      %p207 = pneg %p118
      %p208 = pneg %p147
      %p209 = pneg %p144
      %p210 = scmp.lt.s32.totalorder %s16, 1
      %s211 = scalar_select %p210, %s16, 1
      %s212 = smul.addr %s211, 2
      %s213 = smul.addr %s212, 8
      %s214 = scalar_lea.vmem %s5, %s213
      %p215 = scmp.lt.s32.totalorder %s16, 1
      %s216 = scalar_select %p215, %s16, 1
      %s217 = smul.addr %s216, 2
      %s218 = smul.addr %s217, 4
      %s219 = scalar_lea.vmem %s0, %s218
      %p220 = scmp.lt.s32.totalorder %s16, 1
      %s221 = scalar_select %p220, %s16, 1
      %s222 = smul.addr %s221, 2
      %s223 = smul.addr %s222, 8
      %s224 = scalar_lea.vmem %s5, %s223
      %p225 = scmp.eq.s32.totalorder %s16, 0
      // Predicated region
      $region41: #{channel_compression_forward.1} parent=39 // pred_check
        %p226 = pneg %p225
      $region42: #{channel_compression_forward.1} parent=39 // pred_check_branch
        %228 = sbr.rel (%p226) target = $region44
      $region43: #{channel_compression_forward.1} parent=39 // pred_region
        %229 = vst [vmem:[#allocation2] sm:$0xff] 0.0
        %230 = vst [vmem:[#allocation2 + $0x8] sm:$0xff] 0.0
        %231 = vst [vmem:[#allocation2 + $0x10] sm:$0xff] 0.0
        %232 = vst [vmem:[#allocation2 + $0x18] sm:$0xff] 0.0
        %233 = vst [vmem:[#allocation3] sm:$0xff] 0.0
        %234 = vst [vmem:[#allocation3 + $0x8] sm:$0xff] 0.0
        %235 = vst [vmem:[#allocation3 + $0x10] sm:$0xff] 0.0
        %236 = vst [vmem:[#allocation3 + $0x18] sm:$0xff] 0.0
        %237 = vst [vmem:[#allocation3 + $0x20] sm:$0xff] 0.0
        %238 = vst [vmem:[#allocation3 + $0x28] sm:$0xff] 0.0
        %239 = vst [vmem:[#allocation3 + $0x30] sm:$0xff] 0.0
        %240 = vst [vmem:[#allocation3 + $0x38] sm:$0xff] 0.0
        %241 = vst [vmem:[#allocation3 + $0x40] sm:$0xff] 0.0
        %242 = vst [vmem:[#allocation3 + $0x48] sm:$0xff] 0.0
        %243 = vst [vmem:[#allocation3 + $0x50] sm:$0xff] 0.0
        %244 = vst [vmem:[#allocation3 + $0x58] sm:$0xff] 0.0
        %245 = vst [vmem:[#allocation3 + $0x60] sm:$0xff] 0.0
        %246 = vst [vmem:[#allocation3 + $0x68] sm:$0xff] 0.0
        %247 = vst [vmem:[#allocation3 + $0x70] sm:$0xff] 0.0
        %248 = vst [vmem:[#allocation3 + $0x78] sm:$0xff] 0.0
        %249 = vst [vmem:[#allocation3 + $0x80] sm:$0xff] 0.0
        %250 = vst [vmem:[#allocation3 + $0x88] sm:$0xff] 0.0
        %251 = vst [vmem:[#allocation3 + $0x90] sm:$0xff] 0.0
        %252 = vst [vmem:[#allocation3 + $0x98] sm:$0xff] 0.0
        %253 = vst [vmem:[#allocation3 + $0xa0] sm:$0xff] 0.0
        %254 = vst [vmem:[#allocation3 + $0xa8] sm:$0xff] 0.0
        %255 = vst [vmem:[#allocation3 + $0xb0] sm:$0xff] 0.0
        %256 = vst [vmem:[#allocation3 + $0xb8] sm:$0xff] 0.0
        %257 = vst [vmem:[#allocation3 + $0xc0] sm:$0xff] 0.0
        %258 = vst [vmem:[#allocation3 + $0xc8] sm:$0xff] 0.0
        %259 = vst [vmem:[#allocation3 + $0xd0] sm:$0xff] 0.0
        %260 = vst [vmem:[#allocation3 + $0xd8] sm:$0xff] 0.0
        %261 = vst [vmem:[#allocation3 + $0xe0] sm:$0xff] 0.0
        %262 = vst [vmem:[#allocation3 + $0xe8] sm:$0xff] 0.0
        %263 = vst [vmem:[#allocation3 + $0xf0] sm:$0xff] 0.0
        %264 = vst [vmem:[#allocation3 + $0xf8] sm:$0xff] 0.0
        %265 = vst [vmem:[#allocation3 + $0x100] sm:$0xff] 0.0
        %266 = vst [vmem:[#allocation3 + $0x108] sm:$0xff] 0.0
        %267 = vst [vmem:[#allocation3 + $0x110] sm:$0xff] 0.0
        %268 = vst [vmem:[#allocation3 + $0x118] sm:$0xff] 0.0
        %269 = vst [vmem:[#allocation3 + $0x120] sm:$0xff] 0.0
        %270 = vst [vmem:[#allocation3 + $0x128] sm:$0xff] 0.0
        %271 = vst [vmem:[#allocation3 + $0x130] sm:$0xff] 0.0
        %272 = vst [vmem:[#allocation3 + $0x138] sm:$0xff] 0.0
        %273 = vst [vmem:[#allocation3 + $0x140] sm:$0xff] 0.0
        %274 = vst [vmem:[#allocation3 + $0x148] sm:$0xff] 0.0
        %275 = vst [vmem:[#allocation3 + $0x150] sm:$0xff] 0.0
        %276 = vst [vmem:[#allocation3 + $0x158] sm:$0xff] 0.0
        %277 = vst [vmem:[#allocation3 + $0x160] sm:$0xff] 0.0
        %278 = vst [vmem:[#allocation3 + $0x168] sm:$0xff] 0.0
        %279 = vst [vmem:[#allocation3 + $0x170] sm:$0xff] 0.0
        %280 = vst [vmem:[#allocation3 + $0x178] sm:$0xff] 0.0
        %281 = vst [vmem:[#allocation3 + $0x180] sm:$0xff] 0.0
        %282 = vst [vmem:[#allocation3 + $0x188] sm:$0xff] 0.0
        %283 = vst [vmem:[#allocation3 + $0x190] sm:$0xff] 0.0
        %284 = vst [vmem:[#allocation3 + $0x198] sm:$0xff] 0.0
        %285 = vst [vmem:[#allocation3 + $0x1a0] sm:$0xff] 0.0
        %286 = vst [vmem:[#allocation3 + $0x1a8] sm:$0xff] 0.0
        %287 = vst [vmem:[#allocation3 + $0x1b0] sm:$0xff] 0.0
        %288 = vst [vmem:[#allocation3 + $0x1b8] sm:$0xff] 0.0
        %289 = vst [vmem:[#allocation3 + $0x1c0] sm:$0xff] 0.0
        %290 = vst [vmem:[#allocation3 + $0x1c8] sm:$0xff] 0.0
        %291 = vst [vmem:[#allocation3 + $0x1d0] sm:$0xff] 0.0
        %292 = vst [vmem:[#allocation3 + $0x1d8] sm:$0xff] 0.0
        %293 = vst [vmem:[#allocation3 + $0x1e0] sm:$0xff] 0.0
        %294 = vst [vmem:[#allocation3 + $0x1e8] sm:$0xff] 0.0
        %295 = vst [vmem:[#allocation3 + $0x1f0] sm:$0xff] 0.0
        %296 = vst [vmem:[#allocation3 + $0x1f8] sm:$0xff] 0.0
      $region44: #{channel_compression_forward.1} parent=39 // pred_fallthru
        _
      %v297 = vld [vmem:[%s1] ss:$8 sm:$0x3]
      %s298 = scalar_lea.vmem %s1, 1
      %v299 = vld [vmem:[%s298] ss:$8 sm:$0x3]
      %s300 = scalar_lea.vmem %s1, 2
      %v301 = vld [vmem:[%s300] ss:$8 sm:$0x3]
      %s302 = scalar_lea.vmem %s1, 3
      %v303 = vld [vmem:[%s302] ss:$8 sm:$0x3]
      %s304 = scalar_lea.vmem %s1, 5
      %v305 = vld [vmem:[%s304] ss:$8 sm:$0x3]
      %s306 = scalar_lea.vmem %s1, 6
      %v307 = vld [vmem:[%s306] ss:$8 sm:$0x3]
      %s308 = scalar_lea.vmem %s1, 7
      %v309 = vld [vmem:[%s308] ss:$8 sm:$0x3]
      %s310 = scalar_lea.vmem %s1, 16
      %v311 = vld [vmem:[%s310] ss:$8 sm:$0x3]
      %v312 = vld [vmem:[%s219] sm:$0xff]
      %v314 = vcombine.high %v312, %v312
      %316 = vst [vmem:[#allocation2 + $0x8] sm:$0xf] %v312
      %317 = vst [vmem:[#allocation2 + $0x10] sm:$0xf] %v314
      %v318 = vld [vmem:[#allocation2] sm:$0xf]
      %v319 = vld [vmem:[#allocation2 + $0x8] sm:$0xf]
      %v320 = vld [vmem:[#allocation2 + $0x10] sm:$0xf]
      %v322 = vlaneseq
      %v323 = vshrl.u32 %v322, 7
      %v324 = vsub.s32 0, %v323
      %v325 = vrot.slane %v297, %v324
      %v326 = vlaneseq
      %v327 = vshrl.u32 %v326, 7
      %v328 = vsub.s32 1, %v327
      %v329 = vrot.slane %v297, %v328
      %330 = vrot.lane.b32.xlu0 %v325, 55
      %v331 = vpop.permute.xlu0 %330
      %332 = vrot.lane.b32.xlu0 %v329, 55
      %v333 = vpop.permute.xlu0 %332
      %vm334 = vcmask 449536
      %v335 = vsel %vm334, %v331, %v333
      %v339 = vmul.f32 %v318, %v331
      %v340 = vmul.f32 %v319, %v335
      %v341 = vmul.f32 %v320, %v333
      %v343 = vlaneseq
      %v344 = vshrl.u32 %v343, 7
      %v345 = vsub.s32 0, %v344
      %v346 = vrot.slane %v299, %v345
      %v347 = vlaneseq
      %v348 = vshrl.u32 %v347, 7
      %v349 = vsub.s32 1, %v348
      %v350 = vrot.slane %v299, %v349
      %351 = vrot.lane.b32.xlu0 %v346, 56
      %v352 = vpop.permute.xlu0 %351
      %353 = vrot.lane.b32.xlu0 %v350, 56
      %v354 = vpop.permute.xlu0 %353
      %vm355 = vcmask 457728
      %v356 = vsel %vm355, %v352, %v354
      %v360 = vmul.f32 %v318, %v352
      %v361 = vmul.f32 %v319, %v356
      %v362 = vmul.f32 %v320, %v354
      %v366 = vrot.slane %v360, 4
      %v367 = vrot.slane %v361, 4
      %v368 = vrot.slane %v362, 4
      %369 = vrot.lane.b32.xlu0 %v366, 127
      %v370 = vpop.permute.xlu0 %369
      %371 = vrot.lane.b32.xlu0 %v367, 127
      %v372 = vpop.permute.xlu0 %371
      %373 = vrot.lane.b32.xlu0 %v368, 127
      %v374 = vpop.permute.xlu0 %373
      %vm375 = vcmask 1039360
      %v376 = vsel %vm375, %v370, %v372
      %v377 = vsel %vm375, %v372, %v374
      %vm381 = vcmask 1043456
      %v382 = vsel %vm381, %v339, %v376
      %v383 = vsel %vm381, %v340, %v377
      %v384 = vsel %vm381, %v341, %v374
      %388 = vrot.lane.b32.xlu0 %v382, 73
      %v389 = vpop.permute.xlu0 %388
      %390 = vrot.lane.b32.xlu0 %v383, 73
      %v391 = vpop.permute.xlu0 %390
      %392 = vrot.lane.b32.xlu0 %v384, 73
      %v393 = vpop.permute.xlu0 %392
      %vm394 = vcmask 596992
      %v395 = vsel %vm394, %v389, %v391
      %v396 = vsel %vm394, %v391, %v393
      %399 = vst [vmem:[#allocation3] sm:$0xff] %v395
      %400 = vst [vmem:[#allocation3 + $0x8] sm:$0xff] %v396
      %v401 = vld [vmem:[#allocation2] sm:$0xf]
      %v402 = vld [vmem:[#allocation2 + $0x8] sm:$0xf]
      %v403 = vld [vmem:[#allocation2 + $0x10] sm:$0xf]
      %v405 = vlaneseq
      %v406 = vshrl.u32 %v405, 7
      %v407 = vsub.s32 0, %v406
      %v408 = vrot.slane %v301, %v407
      %v409 = vlaneseq
      %v410 = vshrl.u32 %v409, 7
      %v411 = vsub.s32 1, %v410
      %v412 = vrot.slane %v301, %v411
      %413 = vrot.lane.b32.xlu0 %v408, 57
      %v414 = vpop.permute.xlu0 %413
      %415 = vrot.lane.b32.xlu0 %v412, 57
      %v416 = vpop.permute.xlu0 %415
      %vm417 = vcmask 465920
      %v418 = vsel %vm417, %v414, %v416
      %v422 = vmul.f32 %v401, %v414
      %v423 = vmul.f32 %v402, %v418
      %v424 = vmul.f32 %v403, %v416
      %v426 = vlaneseq
      %v427 = vshrl.u32 %v426, 7
      %v428 = vsub.s32 0, %v427
      %v429 = vrot.slane %v303, %v428
      %v430 = vlaneseq
      %v431 = vshrl.u32 %v430, 7
      %v432 = vsub.s32 1, %v431
      %v433 = vrot.slane %v303, %v432
      %434 = vrot.lane.b32.xlu0 %v429, 63
      %v435 = vpop.permute.xlu0 %434
      %436 = vrot.lane.b32.xlu0 %v433, 63
      %v437 = vpop.permute.xlu0 %436
      %vm438 = vcmask 515072
      %v439 = vsel %vm438, %v435, %v437
      %v443 = vmul.f32 %v401, %v435
      %v444 = vmul.f32 %v402, %v439
      %v445 = vmul.f32 %v403, %v437
      %v449 = vrot.slane %v443, 4
      %v450 = vrot.slane %v444, 4
      %v451 = vrot.slane %v445, 4
      %452 = vrot.lane.b32.xlu0 %v449, 122
      %v453 = vpop.permute.xlu0 %452
      %454 = vrot.lane.b32.xlu0 %v450, 122
      %v455 = vpop.permute.xlu0 %454
      %456 = vrot.lane.b32.xlu0 %v451, 122
      %v457 = vpop.permute.xlu0 %456
      %vm458 = vcmask 998400
      %v459 = vsel %vm458, %v453, %v455
      %v460 = vsel %vm458, %v455, %v457
      %v464 = vsel %vm381, %v422, %v459
      %v465 = vsel %vm381, %v423, %v460
      %v466 = vsel %vm381, %v424, %v457
      %470 = vrot.lane.b32.xlu0 %v464, 71
      %v471 = vpop.permute.xlu0 %470
      %472 = vrot.lane.b32.xlu0 %v465, 71
      %v473 = vpop.permute.xlu0 %472
      %474 = vrot.lane.b32.xlu0 %v466, 71
      %v475 = vpop.permute.xlu0 %474
      %vm476 = vcmask 580608
      %v477 = vsel %vm476, %v471, %v473
      %v478 = vsel %vm476, %v473, %v475
      %481 = vst [vmem:[#allocation3 + $0x10] sm:$0xff] %v477
      %482 = vst [vmem:[#allocation3 + $0x18] sm:$0xff] %v478
      %v483 = vld [vmem:[#allocation2] sm:$0xf]
      %v484 = vld [vmem:[#allocation2 + $0x8] sm:$0xf]
      %v485 = vld [vmem:[#allocation2 + $0x10] sm:$0xf]
      %v487 = vlaneseq
      %v488 = vshrl.u32 %v487, 7
      %v489 = vsub.s32 0, %v488
      %v490 = vrot.slane %v305, %v489
      %v491 = vlaneseq
      %v492 = vshrl.u32 %v491, 7
      %v493 = vsub.s32 1, %v492
      %v494 = vrot.slane %v305, %v493
      %495 = vrot.lane.b32.xlu0 %v490, 65
      %v496 = vpop.permute.xlu0 %495
      %497 = vrot.lane.b32.xlu0 %v494, 65
      %v498 = vpop.permute.xlu0 %497
      %vm499 = vcmask 531456
      %v500 = vsel %vm499, %v496, %v498
      %v504 = vmul.f32 %v483, %v496
      %v505 = vmul.f32 %v484, %v500
      %v506 = vmul.f32 %v485, %v498
      %v510 = vrot.slane %v504, 4
      %v511 = vrot.slane %v505, 4
      %v512 = vrot.slane %v506, 4
      %513 = vrot.lane.b32.xlu0 %v510, 127
      %v514 = vpop.permute.xlu0 %513
      %515 = vrot.lane.b32.xlu0 %v511, 127
      %v516 = vpop.permute.xlu0 %515
      %517 = vrot.lane.b32.xlu0 %v512, 127
      %v518 = vpop.permute.xlu0 %517
      %v519 = vsel %vm375, %v514, %v516
      %v520 = vsel %vm375, %v516, %v518
      %v524 = vsel %vm381, %v483, %v519
      %v525 = vsel %vm381, %v484, %v520
      %v526 = vsel %vm381, %v485, %v518
      %530 = vrot.lane.b32.xlu0 %v524, 64
      %v531 = vpop.permute.xlu0 %530
      %532 = vrot.lane.b32.xlu0 %v525, 64
      %v533 = vpop.permute.xlu0 %532
      %534 = vrot.lane.b32.xlu0 %v526, 64
      %v535 = vpop.permute.xlu0 %534
      %vm536 = vcmask 523264
      %v537 = vsel %vm536, %v531, %v533
      %v538 = vsel %vm536, %v533, %v535
      %541 = vst [vmem:[#allocation3 + $0x20] sm:$0xff] %v537
      %542 = vst [vmem:[#allocation3 + $0x28] sm:$0xff] %v538
      %v543 = vld [vmem:[#allocation2] sm:$0xf]
      %v544 = vld [vmem:[#allocation2 + $0x8] sm:$0xf]
      %v545 = vld [vmem:[#allocation2 + $0x10] sm:$0xf]
      %v547 = vlaneseq
      %v548 = vshrl.u32 %v547, 7
      %v549 = vsub.s32 0, %v548
      %v550 = vrot.slane %v307, %v549
      %v551 = vlaneseq
      %v552 = vshrl.u32 %v551, 7
      %v553 = vsub.s32 1, %v552
      %v554 = vrot.slane %v307, %v553
      %555 = vrot.lane.b32.xlu0 %v550, 71
      %v556 = vpop.permute.xlu0 %555
      %557 = vrot.lane.b32.xlu0 %v554, 71
      %v558 = vpop.permute.xlu0 %557
      %v559 = vsel %vm476, %v556, %v558
      %v563 = vmul.f32 %v543, %v556
      %v564 = vmul.f32 %v544, %v559
      %v565 = vmul.f32 %v545, %v558
      %v567 = vlaneseq
      %v568 = vshrl.u32 %v567, 7
      %v569 = vsub.s32 0, %v568
      %v570 = vrot.slane %v309, %v569
      %v571 = vlaneseq
      %v572 = vshrl.u32 %v571, 7
      %v573 = vsub.s32 1, %v572
      %v574 = vrot.slane %v309, %v573
      %575 = vrot.lane.b32.xlu0 %v570, 72
      %v576 = vpop.permute.xlu0 %575
      %577 = vrot.lane.b32.xlu0 %v574, 72
      %v578 = vpop.permute.xlu0 %577
      %vm579 = vcmask 588800
      %v580 = vsel %vm579, %v576, %v578
      %v584 = vmul.f32 %v543, %v576
      %v585 = vmul.f32 %v544, %v580
      %v586 = vmul.f32 %v545, %v578
      %v590 = vrot.slane %v584, 4
      %v591 = vrot.slane %v585, 4
      %v592 = vrot.slane %v586, 4
      %593 = vrot.lane.b32.xlu0 %v590, 127
      %v594 = vpop.permute.xlu0 %593
      %595 = vrot.lane.b32.xlu0 %v591, 127
      %v596 = vpop.permute.xlu0 %595
      %597 = vrot.lane.b32.xlu0 %v592, 127
      %v598 = vpop.permute.xlu0 %597
      %v599 = vsel %vm375, %v594, %v596
      %v600 = vsel %vm375, %v596, %v598
      %v604 = vsel %vm381, %v563, %v599
      %v605 = vsel %vm381, %v564, %v600
      %v606 = vsel %vm381, %v565, %v598
      %610 = vrot.lane.b32.xlu0 %v604, 57
      %v611 = vpop.permute.xlu0 %610
      %612 = vrot.lane.b32.xlu0 %v605, 57
      %v613 = vpop.permute.xlu0 %612
      %614 = vrot.lane.b32.xlu0 %v606, 57
      %v615 = vpop.permute.xlu0 %614
      %v616 = vsel %vm417, %v611, %v613
      %v617 = vsel %vm417, %v613, %v615
      %620 = vst [vmem:[#allocation3 + $0x30] sm:$0xff] %v616
      %621 = vst [vmem:[#allocation3 + $0x38] sm:$0xff] %v617
      %v622 = vld [vmem:[#allocation2] sm:$0xf]
      %v623 = vld [vmem:[#allocation2 + $0x8] sm:$0xf]
      %v624 = vld [vmem:[#allocation2 + $0x10] sm:$0xf]
      %v626 = vlaneseq
      %v627 = vshrl.u32 %v626, 7
      %v628 = vsub.s32 0, %v627
      %v629 = vrot.slane %v311, %v628
      %v630 = vlaneseq
      %v631 = vshrl.u32 %v630, 7
      %v632 = vsub.s32 1, %v631
      %v633 = vrot.slane %v311, %v632
      %634 = vrot.lane.b32.xlu0 %v629, 73
      %v635 = vpop.permute.xlu0 %634
      %636 = vrot.lane.b32.xlu0 %v633, 73
      %v637 = vpop.permute.xlu0 %636
      %v638 = vsel %vm394, %v635, %v637
      %v642 = vmul.f32 %v622, %v635
      %v643 = vmul.f32 %v623, %v638
      %v644 = vmul.f32 %v624, %v637
      %645 = vrot.lane.b32.xlu0 %v325, 119
      %v646 = vpop.permute.xlu0 %645
      %647 = vrot.lane.b32.xlu0 %v329, 119
      %v648 = vpop.permute.xlu0 %647
      %vm649 = vcmask 973824
      %v650 = vsel %vm649, %v646, %v648
      %v654 = vmul.f32 %v622, %v646
      %v655 = vmul.f32 %v623, %v650
      %v656 = vmul.f32 %v624, %v648
      %v660 = vrot.slane %v654, 4
      %v661 = vrot.slane %v655, 4
      %v662 = vrot.slane %v656, 4
      %663 = vrot.lane.b32.xlu0 %v660, 82
      %v664 = vpop.permute.xlu0 %663
      %665 = vrot.lane.b32.xlu0 %v661, 82
      %v666 = vpop.permute.xlu0 %665
      %667 = vrot.lane.b32.xlu0 %v662, 82
      %v668 = vpop.permute.xlu0 %667
      %vm669 = vcmask 670720
      %v670 = vsel %vm669, %v664, %v666
      %v671 = vsel %vm669, %v666, %v668
      %v675 = vsel %vm381, %v642, %v670
      %v676 = vsel %vm381, %v643, %v671
      %v677 = vsel %vm381, %v644, %v668
      %681 = vrot.lane.b32.xlu0 %v675, 55
      %v682 = vpop.permute.xlu0 %681
      %683 = vrot.lane.b32.xlu0 %v676, 55
      %v684 = vpop.permute.xlu0 %683
      %685 = vrot.lane.b32.xlu0 %v677, 55
      %v686 = vpop.permute.xlu0 %685
      %v687 = vsel %vm334, %v682, %v684
      %v688 = vsel %vm334, %v684, %v686
      %691 = vst [vmem:[#allocation3 + $0x40] sm:$0xff] %v687
      %692 = vst [vmem:[#allocation3 + $0x48] sm:$0xff] %v688
      %v693 = vld [vmem:[#allocation2] sm:$0xf]
      %v694 = vld [vmem:[#allocation2 + $0x8] sm:$0xf]
      %v695 = vld [vmem:[#allocation2 + $0x10] sm:$0xf]
      %696 = vrot.lane.b32.xlu0 %v346, 120
      %v697 = vpop.permute.xlu0 %696
      %698 = vrot.lane.b32.xlu0 %v350, 120
      %v699 = vpop.permute.xlu0 %698
      %vm700 = vcmask 982016
      %v701 = vsel %vm700, %v697, %v699
      %v705 = vmul.f32 %v693, %v697
      %v706 = vmul.f32 %v694, %v701
      %v707 = vmul.f32 %v695, %v699
      %708 = vrot.lane.b32.xlu0 %v408, 121
      %v709 = vpop.permute.xlu0 %708
      %710 = vrot.lane.b32.xlu0 %v412, 121
      %v711 = vpop.permute.xlu0 %710
      %vm712 = vcmask 990208
      %v713 = vsel %vm712, %v709, %v711
      %v717 = vmul.f32 %v693, %v709
      %v718 = vmul.f32 %v694, %v713
      %v719 = vmul.f32 %v695, %v711
      %v723 = vrot.slane %v717, 4
      %v724 = vrot.slane %v718, 4
      %v725 = vrot.slane %v719, 4
      %726 = vrot.lane.b32.xlu0 %v723, 127
      %v727 = vpop.permute.xlu0 %726
      %728 = vrot.lane.b32.xlu0 %v724, 127
      %v729 = vpop.permute.xlu0 %728
      %730 = vrot.lane.b32.xlu0 %v725, 127
      %v731 = vpop.permute.xlu0 %730
      %v732 = vsel %vm375, %v727, %v729
      %v733 = vsel %vm375, %v729, %v731
      %v737 = vsel %vm381, %v705, %v732
      %v738 = vsel %vm381, %v706, %v733
      %v739 = vsel %vm381, %v707, %v731
      %743 = vrot.lane.b32.xlu0 %v737, 8
      %v744 = vpop.permute.xlu0 %743
      %745 = vrot.lane.b32.xlu0 %v738, 8
      %v746 = vpop.permute.xlu0 %745
      %747 = vrot.lane.b32.xlu0 %v739, 8
      %v748 = vpop.permute.xlu0 %747
      %vm749 = vcmask 64512
      %v750 = vsel %vm749, %v744, %v746
      %v751 = vsel %vm749, %v746, %v748
      %754 = vst [vmem:[#allocation3 + $0x50] sm:$0xff] %v750
      %755 = vst [vmem:[#allocation3 + $0x58] sm:$0xff] %v751
      %v756 = vld [vmem:[#allocation2] sm:$0xf]
      %v757 = vld [vmem:[#allocation2 + $0x8] sm:$0xf]
      %v758 = vld [vmem:[#allocation2 + $0x10] sm:$0xf]
      %759 = vrot.lane.b32.xlu0 %v429, 127
      %v760 = vpop.permute.xlu0 %759
      %761 = vrot.lane.b32.xlu0 %v433, 127
      %v762 = vpop.permute.xlu0 %761
      %v763 = vsel %vm375, %v760, %v762
      %v767 = vmul.f32 %v756, %v760
      %v768 = vmul.f32 %v757, %v763
      %v769 = vmul.f32 %v758, %v762
      %v772 = vrot.slane %v757, 4
      %v773 = vrot.slane %v758, 4
      %774 = vrot.lane.b32.xlu0 %v772, 127
      %v775 = vpop.permute.xlu0 %774
      %776 = vrot.lane.b32.xlu0 %v773, 127
      %v777 = vpop.permute.xlu0 %776
      %v778 = vsel %vm375, %v775, %v777
      %v782 = vsel %vm381, %v767, %v775
      %v783 = vsel %vm381, %v768, %v778
      %v784 = vsel %vm381, %v769, %v777
      %788 = vrot.lane.b32.xlu0 %v782, 1
      %v789 = vpop.permute.xlu0 %788
      %790 = vrot.lane.b32.xlu0 %v783, 1
      %v791 = vpop.permute.xlu0 %790
      %792 = vrot.lane.b32.xlu0 %v784, 1
      %v793 = vpop.permute.xlu0 %792
      %vm794 = vcmask 7168
      %v795 = vsel %vm794, %v789, %v791
      %v796 = vsel %vm794, %v791, %v793
      %799 = vst [vmem:[#allocation3 + $0x60] sm:$0xff] %v795
      %800 = vst [vmem:[#allocation3 + $0x68] sm:$0xff] %v796
      %v801 = vld [vmem:[#allocation2 + $0x8] sm:$0xf]
      %v802 = vld [vmem:[#allocation2 + $0x10] sm:$0xf]
      %v803 = vld [vmem:[#allocation2 + $0x18] sm:$0xf]
      %804 = vrot.lane.b32.xlu0 %v490, 1
      %v805 = vpop.permute.xlu0 %804
      %806 = vrot.lane.b32.xlu0 %v494, 1
      %v807 = vpop.permute.xlu0 %806
      %v808 = vsel %vm794, %v805, %v807
      %v812 = vmul.f32 %v801, %v805
      %v813 = vmul.f32 %v802, %v808
      %v814 = vmul.f32 %v803, %v807
      %815 = vrot.lane.b32.xlu0 %v550, 7
      %v816 = vpop.permute.xlu0 %815
      %817 = vrot.lane.b32.xlu0 %v554, 7
      %v818 = vpop.permute.xlu0 %817
      %vm819 = vcmask 56320
      %v820 = vsel %vm819, %v816, %v818
      %v824 = vmul.f32 %v801, %v816
      %v825 = vmul.f32 %v802, %v820
      %v826 = vmul.f32 %v803, %v818
      %v830 = vrot.slane %v824, 4
      %v831 = vrot.slane %v825, 4
      %v832 = vrot.slane %v826, 4
      %833 = vrot.lane.b32.xlu0 %v830, 122
      %v834 = vpop.permute.xlu0 %833
      %835 = vrot.lane.b32.xlu0 %v831, 122
      %v836 = vpop.permute.xlu0 %835
      %837 = vrot.lane.b32.xlu0 %v832, 122
      %v838 = vpop.permute.xlu0 %837
      %v839 = vsel %vm458, %v834, %v836
      %v840 = vsel %vm458, %v836, %v838
      %v844 = vsel %vm381, %v812, %v839
      %v845 = vsel %vm381, %v813, %v840
      %v846 = vsel %vm381, %v814, %v838
      %850 = vrot.lane.b32.xlu0 %v844, 127
      %v851 = vpop.permute.xlu0 %850
      %852 = vrot.lane.b32.xlu0 %v845, 127
      %v853 = vpop.permute.xlu0 %852
      %854 = vrot.lane.b32.xlu0 %v846, 127
      %v855 = vpop.permute.xlu0 %854
      %v856 = vsel %vm375, %v851, %v853
      %v857 = vsel %vm375, %v853, %v855
      %860 = vst [vmem:[#allocation3 + $0x70] sm:$0xff] %v856
      %861 = vst [vmem:[#allocation3 + $0x78] sm:$0xff] %v857
      %v862 = vld [vmem:[#allocation2 + $0x8] sm:$0xf]
      %v863 = vld [vmem:[#allocation2 + $0x10] sm:$0xf]
      %v864 = vld [vmem:[#allocation2 + $0x18] sm:$0xf]
      %865 = vrot.lane.b32.xlu0 %v570, 8
      %v866 = vpop.permute.xlu0 %865
      %867 = vrot.lane.b32.xlu0 %v574, 8
      %v868 = vpop.permute.xlu0 %867
      %v869 = vsel %vm749, %v866, %v868
      %v873 = vmul.f32 %v862, %v866
      %v874 = vmul.f32 %v863, %v869
      %v875 = vmul.f32 %v864, %v868
      %876 = vrot.lane.b32.xlu0 %v629, 9
      %v877 = vpop.permute.xlu0 %876
      %878 = vrot.lane.b32.xlu0 %v633, 9
      %v879 = vpop.permute.xlu0 %878
      %vm880 = vcmask 72704
      %v881 = vsel %vm880, %v877, %v879
      %v885 = vmul.f32 %v862, %v877
      %v886 = vmul.f32 %v863, %v881
      %v887 = vmul.f32 %v864, %v879
      %v891 = vrot.slane %v885, 4
      %v892 = vrot.slane %v886, 4
      %v893 = vrot.slane %v887, 4
      %894 = vrot.lane.b32.xlu0 %v891, 127
      %v895 = vpop.permute.xlu0 %894
      %896 = vrot.lane.b32.xlu0 %v892, 127
      %v897 = vpop.permute.xlu0 %896
      %898 = vrot.lane.b32.xlu0 %v893, 127
      %v899 = vpop.permute.xlu0 %898
      %v900 = vsel %vm375, %v895, %v897
      %v901 = vsel %vm375, %v897, %v899
      %v905 = vsel %vm381, %v873, %v900
      %v906 = vsel %vm381, %v874, %v901
      %v907 = vsel %vm381, %v875, %v899
      %911 = vrot.lane.b32.xlu0 %v905, 120
      %v912 = vpop.permute.xlu0 %911
      %913 = vrot.lane.b32.xlu0 %v906, 120
      %v914 = vpop.permute.xlu0 %913
      %915 = vrot.lane.b32.xlu0 %v907, 120
      %v916 = vpop.permute.xlu0 %915
      %v917 = vsel %vm700, %v912, %v914
      %v918 = vsel %vm700, %v914, %v916
      %921 = vst [vmem:[#allocation3 + $0x80] sm:$0xff] %v917
      %922 = vst [vmem:[#allocation3 + $0x88] sm:$0xff] %v918
      %v923 = vld [vmem:[#allocation2 + $0x8] sm:$0xf]
      %v924 = vld [vmem:[#allocation2 + $0x10] sm:$0xf]
      %v925 = vld [vmem:[#allocation2 + $0x18] sm:$0xf]
      %v926 = vmul.f32 %v923, %v331
      %v927 = vmul.f32 %v924, %v335
      %v928 = vmul.f32 %v925, %v333
      %v929 = vmul.f32 %v923, %v352
      %v930 = vmul.f32 %v924, %v356
      %v931 = vmul.f32 %v925, %v354
      %v935 = vrot.slane %v929, 4
      %v936 = vrot.slane %v930, 4
      %v937 = vrot.slane %v931, 4
      %938 = vrot.lane.b32.xlu0 %v935, 127
      %v939 = vpop.permute.xlu0 %938
      %940 = vrot.lane.b32.xlu0 %v936, 127
      %v941 = vpop.permute.xlu0 %940
      %942 = vrot.lane.b32.xlu0 %v937, 127
      %v943 = vpop.permute.xlu0 %942
      %v944 = vsel %vm375, %v939, %v941
      %v945 = vsel %vm375, %v941, %v943
      %v949 = vsel %vm381, %v926, %v944
      %v950 = vsel %vm381, %v927, %v945
      %v951 = vsel %vm381, %v928, %v943
      %955 = vrot.lane.b32.xlu0 %v949, 73
      %v956 = vpop.permute.xlu0 %955
      %957 = vrot.lane.b32.xlu0 %v950, 73
      %v958 = vpop.permute.xlu0 %957
      %959 = vrot.lane.b32.xlu0 %v951, 73
      %v960 = vpop.permute.xlu0 %959
      %v961 = vsel %vm394, %v956, %v958
      %v962 = vsel %vm394, %v958, %v960
      %965 = vst [vmem:[#allocation3 + $0x90] sm:$0xff] %v961
      %966 = vst [vmem:[#allocation3 + $0x98] sm:$0xff] %v962
      %v967 = vld [vmem:[#allocation2 + $0x8] sm:$0xf]
      %v968 = vld [vmem:[#allocation2 + $0x10] sm:$0xf]
      %v969 = vld [vmem:[#allocation2 + $0x18] sm:$0xf]
      %v970 = vmul.f32 %v967, %v414
      %v971 = vmul.f32 %v968, %v418
      %v972 = vmul.f32 %v969, %v416
      %v973 = vmul.f32 %v967, %v435
      %v974 = vmul.f32 %v968, %v439
      %v975 = vmul.f32 %v969, %v437
      %v979 = vrot.slane %v973, 4
      %v980 = vrot.slane %v974, 4
      %v981 = vrot.slane %v975, 4
      %982 = vrot.lane.b32.xlu0 %v979, 122
      %v983 = vpop.permute.xlu0 %982
      %984 = vrot.lane.b32.xlu0 %v980, 122
      %v985 = vpop.permute.xlu0 %984
      %986 = vrot.lane.b32.xlu0 %v981, 122
      %v987 = vpop.permute.xlu0 %986
      %v988 = vsel %vm458, %v983, %v985
      %v989 = vsel %vm458, %v985, %v987
      %v993 = vsel %vm381, %v970, %v988
      %v994 = vsel %vm381, %v971, %v989
      %v995 = vsel %vm381, %v972, %v987
      %999 = vrot.lane.b32.xlu0 %v993, 71
      %v1000 = vpop.permute.xlu0 %999
      %1001 = vrot.lane.b32.xlu0 %v994, 71
      %v1002 = vpop.permute.xlu0 %1001
      %1003 = vrot.lane.b32.xlu0 %v995, 71
      %v1004 = vpop.permute.xlu0 %1003
      %v1005 = vsel %vm476, %v1000, %v1002
      %v1006 = vsel %vm476, %v1002, %v1004
      %1009 = vst [vmem:[#allocation3 + $0xa0] sm:$0xff] %v1005
      %1010 = vst [vmem:[#allocation3 + $0xa8] sm:$0xff] %v1006
      %v1011 = vld [vmem:[#allocation2 + $0x8] sm:$0xf]
      %v1012 = vld [vmem:[#allocation2 + $0x10] sm:$0xf]
      %v1013 = vld [vmem:[#allocation2 + $0x18] sm:$0xf]
      %v1014 = vmul.f32 %v1011, %v496
      %v1015 = vmul.f32 %v1012, %v500
      %v1016 = vmul.f32 %v1013, %v498
      %v1020 = vrot.slane %v1014, 4
      %v1021 = vrot.slane %v1015, 4
      %v1022 = vrot.slane %v1016, 4
      %1023 = vrot.lane.b32.xlu0 %v1020, 127
      %v1024 = vpop.permute.xlu0 %1023
      %1025 = vrot.lane.b32.xlu0 %v1021, 127
      %v1026 = vpop.permute.xlu0 %1025
      %1027 = vrot.lane.b32.xlu0 %v1022, 127
      %v1028 = vpop.permute.xlu0 %1027
      %v1029 = vsel %vm375, %v1024, %v1026
      %v1030 = vsel %vm375, %v1026, %v1028
      %v1034 = vsel %vm381, %v1011, %v1029
      %v1035 = vsel %vm381, %v1012, %v1030
      %v1036 = vsel %vm381, %v1013, %v1028
      %1040 = vrot.lane.b32.xlu0 %v1034, 64
      %v1041 = vpop.permute.xlu0 %1040
      %1042 = vrot.lane.b32.xlu0 %v1035, 64
      %v1043 = vpop.permute.xlu0 %1042
      %1044 = vrot.lane.b32.xlu0 %v1036, 64
      %v1045 = vpop.permute.xlu0 %1044
      %v1046 = vsel %vm536, %v1041, %v1043
      %v1047 = vsel %vm536, %v1043, %v1045
      %1050 = vst [vmem:[#allocation3 + $0xb0] sm:$0xff] %v1046
      %1051 = vst [vmem:[#allocation3 + $0xb8] sm:$0xff] %v1047
      %v1052 = vld [vmem:[#allocation2 + $0x8] sm:$0xf]
      %v1053 = vld [vmem:[#allocation2 + $0x10] sm:$0xf]
      %v1054 = vld [vmem:[#allocation2 + $0x18] sm:$0xf]
      %v1055 = vmul.f32 %v1052, %v556
      %v1056 = vmul.f32 %v1053, %v559
      %v1057 = vmul.f32 %v1054, %v558
      %v1058 = vmul.f32 %v1052, %v576
      %v1059 = vmul.f32 %v1053, %v580
      %v1060 = vmul.f32 %v1054, %v578
      %v1064 = vrot.slane %v1058, 4
      %v1065 = vrot.slane %v1059, 4
      %v1066 = vrot.slane %v1060, 4
      %1067 = vrot.lane.b32.xlu0 %v1064, 127
      %v1068 = vpop.permute.xlu0 %1067
      %1069 = vrot.lane.b32.xlu0 %v1065, 127
      %v1070 = vpop.permute.xlu0 %1069
      %1071 = vrot.lane.b32.xlu0 %v1066, 127
      %v1072 = vpop.permute.xlu0 %1071
      %v1073 = vsel %vm375, %v1068, %v1070
      %v1074 = vsel %vm375, %v1070, %v1072
      %v1078 = vsel %vm381, %v1055, %v1073
      %v1079 = vsel %vm381, %v1056, %v1074
      %v1080 = vsel %vm381, %v1057, %v1072
      %1084 = vrot.lane.b32.xlu0 %v1078, 57
      %v1085 = vpop.permute.xlu0 %1084
      %1086 = vrot.lane.b32.xlu0 %v1079, 57
      %v1087 = vpop.permute.xlu0 %1086
      %1088 = vrot.lane.b32.xlu0 %v1080, 57
      %v1089 = vpop.permute.xlu0 %1088
      %v1090 = vsel %vm417, %v1085, %v1087
      %v1091 = vsel %vm417, %v1087, %v1089
      %1094 = vst [vmem:[#allocation3 + $0xc0] sm:$0xff] %v1090
      %1095 = vst [vmem:[#allocation3 + $0xc8] sm:$0xff] %v1091
      %v1096 = vld [vmem:[#allocation2 + $0x8] sm:$0xf]
      %v1097 = vld [vmem:[#allocation2 + $0x10] sm:$0xf]
      %v1098 = vld [vmem:[#allocation2 + $0x18] sm:$0xf]
      %v1099 = vmul.f32 %v1096, %v635
      %v1100 = vmul.f32 %v1097, %v638
      %v1101 = vmul.f32 %v1098, %v637
      %1105 = vrot.lane.b32.xlu0 %v1099, 55
      %v1106 = vpop.permute.xlu0 %1105
      %1107 = vrot.lane.b32.xlu0 %v1100, 55
      %v1108 = vpop.permute.xlu0 %1107
      %1109 = vrot.lane.b32.xlu0 %v1101, 55
      %v1110 = vpop.permute.xlu0 %1109
      %v1111 = vsel %vm334, %v1106, %v1108
      %v1112 = vsel %vm334, %v1108, %v1110
      %1115 = vst [vmem:[#allocation3 + $0xd0] sm:$0xf] %v1111
      %1116 = vst [vmem:[#allocation3 + $0xd8] sm:$0xf] %v1112
      %v1117 = vld [vmem:[%s2] sm:$0xff]
      %v1118 = vld [vmem:[#allocation3] sm:$0xff]
      %v1119 = vld [vmem:[#allocation3 + $0x8] sm:$0xff]
      %v1120 = vld [vmem:[#allocation3 + $0x10] sm:$0xff]
      %v1121 = vld [vmem:[#allocation3 + $0x18] sm:$0xff]
      %v1122 = vld [vmem:[#allocation3 + $0x20] sm:$0xff]
      %v1123 = vld [vmem:[#allocation3 + $0x28] sm:$0xff]
      %v1124 = vld [vmem:[#allocation3 + $0x30] sm:$0xff]
      %v1125 = vld [vmem:[#allocation3 + $0x38] sm:$0xff]
      %v1126 = vld [vmem:[#allocation3 + $0x40] sm:$0xff]
      %v1127 = vld [vmem:[#allocation3 + $0x48] sm:$0xff]
      %v1128 = vld [vmem:[#allocation3 + $0x50] sm:$0xff]
      %v1129 = vld [vmem:[#allocation3 + $0x58] sm:$0xff]
      %v1130 = vld [vmem:[#allocation3 + $0x60] sm:$0xff]
      %v1131 = vld [vmem:[#allocation3 + $0x68] sm:$0xff]
      %v1132 = vld [vmem:[#allocation3 + $0x70] sm:$0xff]
      %v1133 = vld [vmem:[#allocation3 + $0x78] sm:$0xff]
      %v1134 = vld [vmem:[#allocation3 + $0x80] sm:$0xff]
      %v1135 = vld [vmem:[#allocation3 + $0x88] sm:$0xff]
      %v1136 = vld [vmem:[#allocation3 + $0x90] sm:$0xff]
      %v1137 = vld [vmem:[#allocation3 + $0x98] sm:$0xff]
      %v1138 = vld [vmem:[#allocation3 + $0xa0] sm:$0xff]
      %v1139 = vld [vmem:[#allocation3 + $0xa8] sm:$0xff]
      %v1140 = vld [vmem:[#allocation3 + $0xb0] sm:$0xff]
      %v1141 = vld [vmem:[#allocation3 + $0xb8] sm:$0xff]
      %v1142 = vld [vmem:[#allocation3 + $0xc0] sm:$0xff]
      %v1143 = vld [vmem:[#allocation3 + $0xc8] sm:$0xff]
      %v1144 = vld [vmem:[#allocation3 + $0xd0] sm:$0xff]
      %v1145 = vld [vmem:[#allocation3 + $0xd8] sm:$0xff]
      %v1146 = vld [vmem:[#allocation3 + $0xe0] sm:$0xff]
      %v1147 = vld [vmem:[#allocation3 + $0xe8] sm:$0xff]
      %v1148 = vld [vmem:[#allocation3 + $0xf0] sm:$0xff]
      %v1149 = vld [vmem:[#allocation3 + $0xf8] sm:$0xff]
      %1150 = vmatprep.subr.mxu0 %v1119
      %1151 = vmatpush1.msra.mxu0 %v1118
      %1152 = vmatprep.subr.mxu0 %v1121
      %1153 = vmatpush1.msra.mxu0 %v1120
      %1154 = vmatprep.subr.mxu0 %v1123
      %1155 = vmatpush1.msra.mxu0 %v1122
      %1156 = vmatprep.subr.mxu0 %v1125
      %1157 = vmatpush1.msra.mxu0 %v1124
      %1158 = vmatprep.subr.mxu0 %v1127
      %1159 = vmatpush1.msra.mxu0 %v1126
      %1160 = vmatprep.subr.mxu0 %v1129
      %1161 = vmatpush1.msra.mxu0 %v1128
      %1162 = vmatprep.subr.mxu0 %v1131
      %1163 = vmatpush1.msra.mxu0 %v1130
      %1164 = vmatprep.subr.mxu0 %v1133
      %1165 = vmatpush1.msra.mxu0 %v1132
      %1166 = vmatprep.subr.mxu0 %v1135
      %1167 = vmatpush1.msra.mxu0 %v1134
      %1168 = vmatprep.subr.mxu0 %v1137
      %1169 = vmatpush1.msra.mxu0 %v1136
      %1170 = vmatprep.subr.mxu0 %v1139
      %1171 = vmatpush1.msra.mxu0 %v1138
      %1172 = vmatprep.subr.mxu0 %v1141
      %1173 = vmatpush1.msra.mxu0 %v1140
      %1174 = vmatprep.subr.mxu0 %v1143
      %1175 = vmatpush1.msra.mxu0 %v1142
      %1176 = vmatprep.subr.mxu0 %v1145
      %1177 = vmatpush1.msra.mxu0 %v1144
      %1178 = vmatprep.subr.mxu0 %v1147
      %1179 = vmatpush1.msra.mxu0 %v1146
      %1180 = vmatprep.subr.mxu0 %v1149
      %1181 = vmatpush1.msra.mxu0 %v1148
      %1182 = vmatprep.subr.mxu0 0.0
      %1183 = vmatpush1.msra.mxu0 0.0
      %1184 = vmatprep.subr.mxu0 0.0
      %1185 = vmatpush1.msra.mxu0 0.0
      %1186 = vmatprep.subr.mxu0 0.0
      %1187 = vmatpush1.msra.mxu0 0.0
      %1188 = vmatprep.subr.mxu0 0.0
      %1189 = vmatpush1.msra.mxu0 0.0
      %1190 = vmatprep.subr.mxu0 0.0
      %1191 = vmatpush1.msra.mxu0 0.0
      %1192 = vmatprep.subr.mxu0 0.0
      %1193 = vmatpush1.msra.mxu0 0.0
      %1194 = vmatprep.subr.mxu0 0.0
      %1195 = vmatpush1.msra.mxu0 0.0
      %1196 = vmatprep.subr.mxu0 0.0
      %1197 = vmatpush1.msra.mxu0 0.0
      %1198 = vmatprep.subr.mxu0 0.0
      %1199 = vmatpush1.msra.mxu0 0.0
      %1200 = vmatprep.subr.mxu0 0.0
      %1201 = vmatpush1.msra.mxu0 0.0
      %1202 = vmatprep.subr.mxu0 0.0
      %1203 = vmatpush1.msra.mxu0 0.0
      %1204 = vmatprep.subr.mxu0 0.0
      %1205 = vmatpush1.msra.mxu0 0.0
      %1206 = vmatprep.subr.mxu0 0.0
      %1207 = vmatpush1.msra.mxu0 0.0
      %1208 = vmatprep.subr.mxu0 0.0
      %1209 = vmatpush1.msra.mxu0 0.0
      %1210 = vmatprep.subr.mxu0 0.0
      %1211 = vmatpush1.msra.mxu0 0.0
      %1212 = vmatprep.subr.mxu0 0.0
      %1213 = vmatpush1.msra.mxu0 0.0
      %1214 = vmatprep.mubr.f32.mxu0 0.0
      %1215 = vmatmul.mubr.f32.gmra.mrb[0].mxu0 %v1117
      %v1216 = vpop.f32.mrb[0].mxu0
      %v1217 = vadd.f32 0.0, %v1216
      %v1218 = vpop.f32.mrb[0].mxu0
      %v1219 = vadd.f32 0.0, %v1218
      %1220 = vdwg.mxu0
      %v1221 = vadd.f32 %v1217, %v1219
      %1222 = vadd.xlane.f32.xlu0 %v1221
      %v1223 = vpop.xlane.xlu0 %1222
      %v1224 = vrcp.pop 256.0
      %v1225 = vmul.f32 %v1223, %v1224
      %v1226 = vsub.f32 %v1217, %v1225
      %v1227 = vsub.f32 %v1219, %v1225
      %v1228 = vmul.f32 %v1226, %v1226
      %v1229 = vmul.f32 %v1227, %v1227
      %v1230 = vadd.f32 %v1228, %v1229
      %1231 = vadd.xlane.f32.xlu0 %v1230
      %v1232 = vpop.xlane.xlu0 %1231
      %v1233 = vmul.f32 %v1232, %v1224
      %v1234 = vadd.f32 %v1233, 1e-05
      %v1235 = vrsqrt.pop %v1234
      %v1236 = vmul.f32 %v1226, %v1235
      %v1237 = vmul.f32 %v1227, %v1235
      %v1238 = vmax.f32 %v1236, 0.0
      %v1239 = vmax.f32 %v1237, 0.0
      %1240 = vst [vmem:[#allocation2 + $0x8] sm:$0xff] %v1238
      %1241 = vst [vmem:[#allocation2 + $0x10] sm:$0xff] %v1239
      %v1242 = vld [vmem:[#allocation2] sm:$0xff]
      %v1243 = vld [vmem:[#allocation2 + $0x8] sm:$0xff]
      %v1244 = vld [vmem:[#allocation2 + $0x10] sm:$0xff]
      %v1245 = vmul.f32 %v1242, %v331
      %v1246 = vmul.f32 %v1243, %v335
      %v1247 = vmul.f32 %v1244, %v333
      %1251 = vrot.lane.b32.xlu0 %v1245, 73
      %v1252 = vpop.permute.xlu0 %1251
      %1253 = vrot.lane.b32.xlu0 %v1246, 73
      %v1254 = vpop.permute.xlu0 %1253
      %1255 = vrot.lane.b32.xlu0 %v1247, 73
      %v1256 = vpop.permute.xlu0 %1255
      %v1257 = vsel %vm394, %v1252, %v1254
      %v1258 = vsel %vm394, %v1254, %v1256
      %1261 = vst [vmem:[#allocation3] sm:$0xff] %v1257
      %1262 = vst [vmem:[#allocation3 + $0x8] sm:$0xff] %v1258
      %v1263 = vld [vmem:[#allocation2] sm:$0xff]
      %v1264 = vld [vmem:[#allocation2 + $0x8] sm:$0xff]
      %v1265 = vld [vmem:[#allocation2 + $0x10] sm:$0xff]
      %v1266 = vmul.f32 %v1263, %v352
      %v1267 = vmul.f32 %v1264, %v356
      %v1268 = vmul.f32 %v1265, %v354
      %1272 = vrot.lane.b32.xlu0 %v1266, 72
      %v1273 = vpop.permute.xlu0 %1272
      %1274 = vrot.lane.b32.xlu0 %v1267, 72
      %v1275 = vpop.permute.xlu0 %1274
      %1276 = vrot.lane.b32.xlu0 %v1268, 72
      %v1277 = vpop.permute.xlu0 %1276
      %v1278 = vsel %vm579, %v1273, %v1275
      %v1279 = vsel %vm579, %v1275, %v1277
      %1282 = vst [vmem:[#allocation3 + $0x10] sm:$0xff] %v1278
      %1283 = vst [vmem:[#allocation3 + $0x18] sm:$0xff] %v1279
      %v1284 = vld [vmem:[#allocation2] sm:$0xff]
      %v1285 = vld [vmem:[#allocation2 + $0x8] sm:$0xff]
      %v1286 = vld [vmem:[#allocation2 + $0x10] sm:$0xff]
      %v1287 = vmul.f32 %v1284, %v414
      %v1288 = vmul.f32 %v1285, %v418
      %v1289 = vmul.f32 %v1286, %v416
      %1293 = vrot.lane.b32.xlu0 %v1287, 71
      %v1294 = vpop.permute.xlu0 %1293
      %1295 = vrot.lane.b32.xlu0 %v1288, 71
      %v1296 = vpop.permute.xlu0 %1295
      %1297 = vrot.lane.b32.xlu0 %v1289, 71
      %v1298 = vpop.permute.xlu0 %1297
      %v1299 = vsel %vm476, %v1294, %v1296
      %v1300 = vsel %vm476, %v1296, %v1298
      %1303 = vst [vmem:[#allocation3 + $0x20] sm:$0xff] %v1299
      %1304 = vst [vmem:[#allocation3 + $0x28] sm:$0xff] %v1300
      %v1305 = vld [vmem:[#allocation2] sm:$0xff]
      %v1306 = vld [vmem:[#allocation2 + $0x8] sm:$0xff]
      %v1307 = vld [vmem:[#allocation2 + $0x10] sm:$0xff]
      %v1308 = vmul.f32 %v1305, %v435
      %v1309 = vmul.f32 %v1306, %v439
      %v1310 = vmul.f32 %v1307, %v437
      %1314 = vrot.lane.b32.xlu0 %v1308, 65
      %v1315 = vpop.permute.xlu0 %1314
      %1316 = vrot.lane.b32.xlu0 %v1309, 65
      %v1317 = vpop.permute.xlu0 %1316
      %1318 = vrot.lane.b32.xlu0 %v1310, 65
      %v1319 = vpop.permute.xlu0 %1318
      %v1320 = vsel %vm499, %v1315, %v1317
      %v1321 = vsel %vm499, %v1317, %v1319
      %1324 = vst [vmem:[#allocation3 + $0x30] sm:$0xff] %v1320
      %1325 = vst [vmem:[#allocation3 + $0x38] sm:$0xff] %v1321
      %v1326 = vld [vmem:[#allocation2] sm:$0xff]
      %v1327 = vld [vmem:[#allocation2 + $0x8] sm:$0xff]
      %v1328 = vld [vmem:[#allocation2 + $0x10] sm:$0xff]
      %1332 = vrot.lane.b32.xlu0 %v1326, 64
      %v1333 = vpop.permute.xlu0 %1332
      %1334 = vrot.lane.b32.xlu0 %v1327, 64
      %v1335 = vpop.permute.xlu0 %1334
      %1336 = vrot.lane.b32.xlu0 %v1328, 64
      %v1337 = vpop.permute.xlu0 %1336
      %v1338 = vsel %vm536, %v1333, %v1335
      %v1339 = vsel %vm536, %v1335, %v1337
      %1342 = vst [vmem:[#allocation3 + $0x40] sm:$0xff] %v1338
      %1343 = vst [vmem:[#allocation3 + $0x48] sm:$0xff] %v1339
      %v1344 = vld [vmem:[#allocation2] sm:$0xff]
      %v1345 = vld [vmem:[#allocation2 + $0x8] sm:$0xff]
      %v1346 = vld [vmem:[#allocation2 + $0x10] sm:$0xff]
      %v1347 = vmul.f32 %v1344, %v496
      %v1348 = vmul.f32 %v1345, %v500
      %v1349 = vmul.f32 %v1346, %v498
      %1353 = vrot.lane.b32.xlu0 %v1347, 63
      %v1354 = vpop.permute.xlu0 %1353
      %1355 = vrot.lane.b32.xlu0 %v1348, 63
      %v1356 = vpop.permute.xlu0 %1355
      %1357 = vrot.lane.b32.xlu0 %v1349, 63
      %v1358 = vpop.permute.xlu0 %1357
      %v1359 = vsel %vm438, %v1354, %v1356
      %v1360 = vsel %vm438, %v1356, %v1358
      %1363 = vst [vmem:[#allocation3 + $0x50] sm:$0xff] %v1359
      %1364 = vst [vmem:[#allocation3 + $0x58] sm:$0xff] %v1360
      %v1365 = vld [vmem:[#allocation2] sm:$0xff]
      %v1366 = vld [vmem:[#allocation2 + $0x8] sm:$0xff]
      %v1367 = vld [vmem:[#allocation2 + $0x10] sm:$0xff]
      %v1368 = vmul.f32 %v1365, %v556
      %v1369 = vmul.f32 %v1366, %v559
      %v1370 = vmul.f32 %v1367, %v558
      %1374 = vrot.lane.b32.xlu0 %v1368, 57
      %v1375 = vpop.permute.xlu0 %1374
      %1376 = vrot.lane.b32.xlu0 %v1369, 57
      %v1377 = vpop.permute.xlu0 %1376
      %1378 = vrot.lane.b32.xlu0 %v1370, 57
      %v1379 = vpop.permute.xlu0 %1378
      %v1380 = vsel %vm417, %v1375, %v1377
      %v1381 = vsel %vm417, %v1377, %v1379
      %1384 = vst [vmem:[#allocation3 + $0x60] sm:$0xff] %v1380
      %1385 = vst [vmem:[#allocation3 + $0x68] sm:$0xff] %v1381
      %v1386 = vld [vmem:[#allocation2] sm:$0xff]
      %v1387 = vld [vmem:[#allocation2 + $0x8] sm:$0xff]
      %v1388 = vld [vmem:[#allocation2 + $0x10] sm:$0xff]
      %v1389 = vmul.f32 %v1386, %v576
      %v1390 = vmul.f32 %v1387, %v580
      %v1391 = vmul.f32 %v1388, %v578
      %1395 = vrot.lane.b32.xlu0 %v1389, 56
      %v1396 = vpop.permute.xlu0 %1395
      %1397 = vrot.lane.b32.xlu0 %v1390, 56
      %v1398 = vpop.permute.xlu0 %1397
      %1399 = vrot.lane.b32.xlu0 %v1391, 56
      %v1400 = vpop.permute.xlu0 %1399
      %v1401 = vsel %vm355, %v1396, %v1398
      %v1402 = vsel %vm355, %v1398, %v1400
      %1405 = vst [vmem:[#allocation3 + $0x70] sm:$0xff] %v1401
      %1406 = vst [vmem:[#allocation3 + $0x78] sm:$0xff] %v1402
      %v1407 = vld [vmem:[#allocation2] sm:$0xff]
      %v1408 = vld [vmem:[#allocation2 + $0x8] sm:$0xff]
      %v1409 = vld [vmem:[#allocation2 + $0x10] sm:$0xff]
      %v1410 = vmul.f32 %v1407, %v635
      %v1411 = vmul.f32 %v1408, %v638
      %v1412 = vmul.f32 %v1409, %v637
      %1416 = vrot.lane.b32.xlu0 %v1410, 55
      %v1417 = vpop.permute.xlu0 %1416
      %1418 = vrot.lane.b32.xlu0 %v1411, 55
      %v1419 = vpop.permute.xlu0 %1418
      %1420 = vrot.lane.b32.xlu0 %v1412, 55
      %v1421 = vpop.permute.xlu0 %1420
      %v1422 = vsel %vm334, %v1417, %v1419
      %v1423 = vsel %vm334, %v1419, %v1421
      %1426 = vst [vmem:[#allocation3 + $0x80] sm:$0xff] %v1422
      %1427 = vst [vmem:[#allocation3 + $0x88] sm:$0xff] %v1423
      %v1428 = vld [vmem:[#allocation2] sm:$0xff]
      %v1429 = vld [vmem:[#allocation2 + $0x8] sm:$0xff]
      %v1430 = vld [vmem:[#allocation2 + $0x10] sm:$0xff]
      %v1431 = vmul.f32 %v1428, %v646
      %v1432 = vmul.f32 %v1429, %v650
      %v1433 = vmul.f32 %v1430, %v648
      %1437 = vrot.lane.b32.xlu0 %v1431, 9
      %v1438 = vpop.permute.xlu0 %1437
      %1439 = vrot.lane.b32.xlu0 %v1432, 9
      %v1440 = vpop.permute.xlu0 %1439
      %1441 = vrot.lane.b32.xlu0 %v1433, 9
      %v1442 = vpop.permute.xlu0 %1441
      %v1443 = vsel %vm880, %v1438, %v1440
      %v1444 = vsel %vm880, %v1440, %v1442
      %1447 = vst [vmem:[#allocation3 + $0x90] sm:$0xff] %v1443
      %1448 = vst [vmem:[#allocation3 + $0x98] sm:$0xff] %v1444
      %v1449 = vld [vmem:[#allocation2] sm:$0xff]
      %v1450 = vld [vmem:[#allocation2 + $0x8] sm:$0xff]
      %v1451 = vld [vmem:[#allocation2 + $0x10] sm:$0xff]
      %v1452 = vmul.f32 %v1449, %v697
      %v1453 = vmul.f32 %v1450, %v701
      %v1454 = vmul.f32 %v1451, %v699
      %1458 = vrot.lane.b32.xlu0 %v1452, 8
      %v1459 = vpop.permute.xlu0 %1458
      %1460 = vrot.lane.b32.xlu0 %v1453, 8
      %v1461 = vpop.permute.xlu0 %1460
      %1462 = vrot.lane.b32.xlu0 %v1454, 8
      %v1463 = vpop.permute.xlu0 %1462
      %v1464 = vsel %vm749, %v1459, %v1461
      %v1465 = vsel %vm749, %v1461, %v1463
      %1468 = vst [vmem:[#allocation3 + $0xa0] sm:$0xff] %v1464
      %1469 = vst [vmem:[#allocation3 + $0xa8] sm:$0xff] %v1465
      %v1470 = vld [vmem:[#allocation2] sm:$0xff]
      %v1471 = vld [vmem:[#allocation2 + $0x8] sm:$0xff]
      %v1472 = vld [vmem:[#allocation2 + $0x10] sm:$0xff]
      %v1473 = vmul.f32 %v1470, %v709
      %v1474 = vmul.f32 %v1471, %v713
      %v1475 = vmul.f32 %v1472, %v711
      %1479 = vrot.lane.b32.xlu0 %v1473, 7
      %v1480 = vpop.permute.xlu0 %1479
      %1481 = vrot.lane.b32.xlu0 %v1474, 7
      %v1482 = vpop.permute.xlu0 %1481
      %1483 = vrot.lane.b32.xlu0 %v1475, 7
      %v1484 = vpop.permute.xlu0 %1483
      %v1485 = vsel %vm819, %v1480, %v1482
      %v1486 = vsel %vm819, %v1482, %v1484
      %1489 = vst [vmem:[#allocation3 + $0xb0] sm:$0xff] %v1485
      %1490 = vst [vmem:[#allocation3 + $0xb8] sm:$0xff] %v1486
      %v1491 = vld [vmem:[#allocation2] sm:$0xff]
      %v1492 = vld [vmem:[#allocation2 + $0x8] sm:$0xff]
      %v1493 = vld [vmem:[#allocation2 + $0x10] sm:$0xff]
      %v1494 = vmul.f32 %v1491, %v760
      %v1495 = vmul.f32 %v1492, %v763
      %v1496 = vmul.f32 %v1493, %v762
      %1500 = vrot.lane.b32.xlu0 %v1494, 1
      %v1501 = vpop.permute.xlu0 %1500
      %1502 = vrot.lane.b32.xlu0 %v1495, 1
      %v1503 = vpop.permute.xlu0 %1502
      %1504 = vrot.lane.b32.xlu0 %v1496, 1
      %v1505 = vpop.permute.xlu0 %1504
      %v1506 = vsel %vm794, %v1501, %v1503
      %v1507 = vsel %vm794, %v1503, %v1505
      %1510 = vst [vmem:[#allocation3 + $0xc0] sm:$0xff] %v1506
      %1511 = vst [vmem:[#allocation3 + $0xc8] sm:$0xff] %v1507
      %v1512 = vld [vmem:[#allocation2 + $0x8] sm:$0xff]
      %v1513 = vld [vmem:[#allocation2 + $0x10] sm:$0xff]
      %1514 = vst [vmem:[#allocation3 + $0xd0] sm:$0xff] %v1512
      %1515 = vst [vmem:[#allocation3 + $0xd8] sm:$0xff] %v1513
      %v1516 = vld [vmem:[#allocation2 + $0x8] sm:$0xff]
      %v1517 = vld [vmem:[#allocation2 + $0x10] sm:$0xff]
      %v1518 = vld [vmem:[#allocation2 + $0x18] sm:$0xff]
      %v1519 = vmul.f32 %v1516, %v805
      %v1520 = vmul.f32 %v1517, %v808
      %v1521 = vmul.f32 %v1518, %v807
      %1525 = vrot.lane.b32.xlu0 %v1519, 127
      %v1526 = vpop.permute.xlu0 %1525
      %1527 = vrot.lane.b32.xlu0 %v1520, 127
      %v1528 = vpop.permute.xlu0 %1527
      %1529 = vrot.lane.b32.xlu0 %v1521, 127
      %v1530 = vpop.permute.xlu0 %1529
      %v1531 = vsel %vm375, %v1526, %v1528
      %v1532 = vsel %vm375, %v1528, %v1530
      %1535 = vst [vmem:[#allocation3 + $0xe0] sm:$0xff] %v1531
      %1536 = vst [vmem:[#allocation3 + $0xe8] sm:$0xff] %v1532
      %v1537 = vld [vmem:[#allocation2 + $0x8] sm:$0xff]
      %v1538 = vld [vmem:[#allocation2 + $0x10] sm:$0xff]
      %v1539 = vld [vmem:[#allocation2 + $0x18] sm:$0xff]
      %v1540 = vmul.f32 %v1537, %v816
      %v1541 = vmul.f32 %v1538, %v820
      %v1542 = vmul.f32 %v1539, %v818
      %1546 = vrot.lane.b32.xlu0 %v1540, 121
      %v1547 = vpop.permute.xlu0 %1546
      %1548 = vrot.lane.b32.xlu0 %v1541, 121
      %v1549 = vpop.permute.xlu0 %1548
      %1550 = vrot.lane.b32.xlu0 %v1542, 121
      %v1551 = vpop.permute.xlu0 %1550
      %v1552 = vsel %vm712, %v1547, %v1549
      %v1553 = vsel %vm712, %v1549, %v1551
      %1556 = vst [vmem:[#allocation3 + $0xf0] sm:$0xff] %v1552
      %1557 = vst [vmem:[#allocation3 + $0xf8] sm:$0xff] %v1553
      %v1558 = vld [vmem:[#allocation2 + $0x8] sm:$0xff]
      %v1559 = vld [vmem:[#allocation2 + $0x10] sm:$0xff]
      %v1560 = vld [vmem:[#allocation2 + $0x18] sm:$0xff]
      %v1561 = vmul.f32 %v1558, %v866
      %v1562 = vmul.f32 %v1559, %v869
      %v1563 = vmul.f32 %v1560, %v868
      %1567 = vrot.lane.b32.xlu0 %v1561, 120
      %v1568 = vpop.permute.xlu0 %1567
      %1569 = vrot.lane.b32.xlu0 %v1562, 120
      %v1570 = vpop.permute.xlu0 %1569
      %1571 = vrot.lane.b32.xlu0 %v1563, 120
      %v1572 = vpop.permute.xlu0 %1571
      %v1573 = vsel %vm700, %v1568, %v1570
      %v1574 = vsel %vm700, %v1570, %v1572
      %1577 = vst [vmem:[#allocation3 + $0x100] sm:$0xff] %v1573
      %1578 = vst [vmem:[#allocation3 + $0x108] sm:$0xff] %v1574
      %v1579 = vld [vmem:[#allocation2 + $0x8] sm:$0xff]
      %v1580 = vld [vmem:[#allocation2 + $0x10] sm:$0xff]
      %v1581 = vld [vmem:[#allocation2 + $0x18] sm:$0xff]
      %v1582 = vmul.f32 %v1579, %v877
      %v1583 = vmul.f32 %v1580, %v881
      %v1584 = vmul.f32 %v1581, %v879
      %1588 = vrot.lane.b32.xlu0 %v1582, 119
      %v1589 = vpop.permute.xlu0 %1588
      %1590 = vrot.lane.b32.xlu0 %v1583, 119
      %v1591 = vpop.permute.xlu0 %1590
      %1592 = vrot.lane.b32.xlu0 %v1584, 119
      %v1593 = vpop.permute.xlu0 %1592
      %v1594 = vsel %vm649, %v1589, %v1591
      %v1595 = vsel %vm649, %v1591, %v1593
      %1598 = vst [vmem:[#allocation3 + $0x110] sm:$0xff] %v1594
      %1599 = vst [vmem:[#allocation3 + $0x118] sm:$0xff] %v1595
      %v1600 = vld [vmem:[#allocation2 + $0x8] sm:$0xff]
      %v1601 = vld [vmem:[#allocation2 + $0x10] sm:$0xff]
      %v1602 = vld [vmem:[#allocation2 + $0x18] sm:$0xff]
      %v1603 = vmul.f32 %v1600, %v331
      %v1604 = vmul.f32 %v1601, %v335
      %v1605 = vmul.f32 %v1602, %v333
      %1609 = vrot.lane.b32.xlu0 %v1603, 73
      %v1610 = vpop.permute.xlu0 %1609
      %1611 = vrot.lane.b32.xlu0 %v1604, 73
      %v1612 = vpop.permute.xlu0 %1611
      %1613 = vrot.lane.b32.xlu0 %v1605, 73
      %v1614 = vpop.permute.xlu0 %1613
      %v1615 = vsel %vm394, %v1610, %v1612
      %v1616 = vsel %vm394, %v1612, %v1614
      %1619 = vst [vmem:[#allocation3 + $0x120] sm:$0xff] %v1615
      %1620 = vst [vmem:[#allocation3 + $0x128] sm:$0xff] %v1616
      %v1621 = vld [vmem:[#allocation2 + $0x8] sm:$0xff]
      %v1622 = vld [vmem:[#allocation2 + $0x10] sm:$0xff]
      %v1623 = vld [vmem:[#allocation2 + $0x18] sm:$0xff]
      %v1624 = vmul.f32 %v1621, %v352
      %v1625 = vmul.f32 %v1622, %v356
      %v1626 = vmul.f32 %v1623, %v354
      %1630 = vrot.lane.b32.xlu0 %v1624, 72
      %v1631 = vpop.permute.xlu0 %1630
      %1632 = vrot.lane.b32.xlu0 %v1625, 72
      %v1633 = vpop.permute.xlu0 %1632
      %1634 = vrot.lane.b32.xlu0 %v1626, 72
      %v1635 = vpop.permute.xlu0 %1634
      %v1636 = vsel %vm579, %v1631, %v1633
      %v1637 = vsel %vm579, %v1633, %v1635
      %1640 = vst [vmem:[#allocation3 + $0x130] sm:$0xff] %v1636
      %1641 = vst [vmem:[#allocation3 + $0x138] sm:$0xff] %v1637
      %v1642 = vld [vmem:[#allocation2 + $0x8] sm:$0xff]
      %v1643 = vld [vmem:[#allocation2 + $0x10] sm:$0xff]
      %v1644 = vld [vmem:[#allocation2 + $0x18] sm:$0xff]
      %v1645 = vmul.f32 %v1642, %v414
      %v1646 = vmul.f32 %v1643, %v418
      %v1647 = vmul.f32 %v1644, %v416
      %1651 = vrot.lane.b32.xlu0 %v1645, 71
      %v1652 = vpop.permute.xlu0 %1651
      %1653 = vrot.lane.b32.xlu0 %v1646, 71
      %v1654 = vpop.permute.xlu0 %1653
      %1655 = vrot.lane.b32.xlu0 %v1647, 71
      %v1656 = vpop.permute.xlu0 %1655
      %v1657 = vsel %vm476, %v1652, %v1654
      %v1658 = vsel %vm476, %v1654, %v1656
      %1661 = vst [vmem:[#allocation3 + $0x140] sm:$0xff] %v1657
      %1662 = vst [vmem:[#allocation3 + $0x148] sm:$0xff] %v1658
      %v1663 = vld [vmem:[#allocation2 + $0x8] sm:$0xff]
      %v1664 = vld [vmem:[#allocation2 + $0x10] sm:$0xff]
      %v1665 = vld [vmem:[#allocation2 + $0x18] sm:$0xff]
      %v1666 = vmul.f32 %v1663, %v435
      %v1667 = vmul.f32 %v1664, %v439
      %v1668 = vmul.f32 %v1665, %v437
      %1672 = vrot.lane.b32.xlu0 %v1666, 65
      %v1673 = vpop.permute.xlu0 %1672
      %1674 = vrot.lane.b32.xlu0 %v1667, 65
      %v1675 = vpop.permute.xlu0 %1674
      %1676 = vrot.lane.b32.xlu0 %v1668, 65
      %v1677 = vpop.permute.xlu0 %1676
      %v1678 = vsel %vm499, %v1673, %v1675
      %v1679 = vsel %vm499, %v1675, %v1677
      %1682 = vst [vmem:[#allocation3 + $0x150] sm:$0xff] %v1678
      %1683 = vst [vmem:[#allocation3 + $0x158] sm:$0xff] %v1679
      %v1684 = vld [vmem:[#allocation2 + $0x8] sm:$0xff]
      %v1685 = vld [vmem:[#allocation2 + $0x10] sm:$0xff]
      %v1686 = vld [vmem:[#allocation2 + $0x18] sm:$0xff]
      %1690 = vrot.lane.b32.xlu0 %v1684, 64
      %v1691 = vpop.permute.xlu0 %1690
      %1692 = vrot.lane.b32.xlu0 %v1685, 64
      %v1693 = vpop.permute.xlu0 %1692
      %1694 = vrot.lane.b32.xlu0 %v1686, 64
      %v1695 = vpop.permute.xlu0 %1694
      %v1696 = vsel %vm536, %v1691, %v1693
      %v1697 = vsel %vm536, %v1693, %v1695
      %1700 = vst [vmem:[#allocation3 + $0x160] sm:$0xff] %v1696
      %1701 = vst [vmem:[#allocation3 + $0x168] sm:$0xff] %v1697
      %v1702 = vld [vmem:[#allocation2 + $0x8] sm:$0xff]
      %v1703 = vld [vmem:[#allocation2 + $0x10] sm:$0xff]
      %v1704 = vld [vmem:[#allocation2 + $0x18] sm:$0xff]
      %v1705 = vmul.f32 %v1702, %v496
      %v1706 = vmul.f32 %v1703, %v500
      %v1707 = vmul.f32 %v1704, %v498
      %1711 = vrot.lane.b32.xlu0 %v1705, 63
      %v1712 = vpop.permute.xlu0 %1711
      %1713 = vrot.lane.b32.xlu0 %v1706, 63
      %v1714 = vpop.permute.xlu0 %1713
      %1715 = vrot.lane.b32.xlu0 %v1707, 63
      %v1716 = vpop.permute.xlu0 %1715
      %v1717 = vsel %vm438, %v1712, %v1714
      %v1718 = vsel %vm438, %v1714, %v1716
      %1721 = vst [vmem:[#allocation3 + $0x170] sm:$0xff] %v1717
      %1722 = vst [vmem:[#allocation3 + $0x178] sm:$0xff] %v1718
      %v1723 = vld [vmem:[#allocation2 + $0x8] sm:$0xff]
      %v1724 = vld [vmem:[#allocation2 + $0x10] sm:$0xff]
      %v1725 = vld [vmem:[#allocation2 + $0x18] sm:$0xff]
      %v1726 = vmul.f32 %v1723, %v556
      %v1727 = vmul.f32 %v1724, %v559
      %v1728 = vmul.f32 %v1725, %v558
      %1732 = vrot.lane.b32.xlu0 %v1726, 57
      %v1733 = vpop.permute.xlu0 %1732
      %1734 = vrot.lane.b32.xlu0 %v1727, 57
      %v1735 = vpop.permute.xlu0 %1734
      %1736 = vrot.lane.b32.xlu0 %v1728, 57
      %v1737 = vpop.permute.xlu0 %1736
      %v1738 = vsel %vm417, %v1733, %v1735
      %v1739 = vsel %vm417, %v1735, %v1737
      %1742 = vst [vmem:[#allocation3 + $0x180] sm:$0xff] %v1738
      %1743 = vst [vmem:[#allocation3 + $0x188] sm:$0xff] %v1739
      %v1744 = vld [vmem:[#allocation2 + $0x8] sm:$0xff]
      %v1745 = vld [vmem:[#allocation2 + $0x10] sm:$0xff]
      %v1746 = vld [vmem:[#allocation2 + $0x18] sm:$0xff]
      %v1747 = vmul.f32 %v1744, %v576
      %v1748 = vmul.f32 %v1745, %v580
      %v1749 = vmul.f32 %v1746, %v578
      %1753 = vrot.lane.b32.xlu0 %v1747, 56
      %v1754 = vpop.permute.xlu0 %1753
      %1755 = vrot.lane.b32.xlu0 %v1748, 56
      %v1756 = vpop.permute.xlu0 %1755
      %1757 = vrot.lane.b32.xlu0 %v1749, 56
      %v1758 = vpop.permute.xlu0 %1757
      %v1759 = vsel %vm355, %v1754, %v1756
      %v1760 = vsel %vm355, %v1756, %v1758
      %1763 = vst [vmem:[#allocation3 + $0x190] sm:$0xff] %v1759
      %1764 = vst [vmem:[#allocation3 + $0x198] sm:$0xff] %v1760
      %v1765 = vld [vmem:[#allocation2 + $0x8] sm:$0xff]
      %v1766 = vld [vmem:[#allocation2 + $0x10] sm:$0xff]
      %v1767 = vld [vmem:[#allocation2 + $0x18] sm:$0xff]
      %v1768 = vmul.f32 %v1765, %v635
      %v1769 = vmul.f32 %v1766, %v638
      %v1770 = vmul.f32 %v1767, %v637
      %1774 = vrot.lane.b32.xlu0 %v1768, 55
      %v1775 = vpop.permute.xlu0 %1774
      %1776 = vrot.lane.b32.xlu0 %v1769, 55
      %v1777 = vpop.permute.xlu0 %1776
      %1778 = vrot.lane.b32.xlu0 %v1770, 55
      %v1779 = vpop.permute.xlu0 %1778
      %v1780 = vsel %vm334, %v1775, %v1777
      %v1781 = vsel %vm334, %v1777, %v1779
      %1784 = vst [vmem:[#allocation3 + $0x1a0] sm:$0xff] %v1780
      %1785 = vst [vmem:[#allocation3 + $0x1a8] sm:$0xff] %v1781
      %v1786 = vld [vmem:[%s3] sm:$0xff]
      %v1787 = vld [vmem:[%s3 + $0x8] sm:$0xff]
      %v1788 = vld [vmem:[#allocation3] sm:$0xff]
      %v1789 = vld [vmem:[#allocation3 + $0x8] sm:$0xff]
      %v1790 = vld [vmem:[#allocation3 + $0x10] sm:$0xff]
      %v1791 = vld [vmem:[#allocation3 + $0x18] sm:$0xff]
      %v1792 = vld [vmem:[#allocation3 + $0x20] sm:$0xff]
      %v1793 = vld [vmem:[#allocation3 + $0x28] sm:$0xff]
      %v1794 = vld [vmem:[#allocation3 + $0x30] sm:$0xff]
      %v1795 = vld [vmem:[#allocation3 + $0x38] sm:$0xff]
      %v1796 = vld [vmem:[#allocation3 + $0x40] sm:$0xff]
      %v1797 = vld [vmem:[#allocation3 + $0x48] sm:$0xff]
      %v1798 = vld [vmem:[#allocation3 + $0x50] sm:$0xff]
      %v1799 = vld [vmem:[#allocation3 + $0x58] sm:$0xff]
      %v1800 = vld [vmem:[#allocation3 + $0x60] sm:$0xff]
      %v1801 = vld [vmem:[#allocation3 + $0x68] sm:$0xff]
      %v1802 = vld [vmem:[#allocation3 + $0x70] sm:$0xff]
      %v1803 = vld [vmem:[#allocation3 + $0x78] sm:$0xff]
      %v1804 = vld [vmem:[#allocation3 + $0x80] sm:$0xff]
      %v1805 = vld [vmem:[#allocation3 + $0x88] sm:$0xff]
      %v1806 = vld [vmem:[#allocation3 + $0x90] sm:$0xff]
      %v1807 = vld [vmem:[#allocation3 + $0x98] sm:$0xff]
      %v1808 = vld [vmem:[#allocation3 + $0xa0] sm:$0xff]
      %v1809 = vld [vmem:[#allocation3 + $0xa8] sm:$0xff]
      %v1810 = vld [vmem:[#allocation3 + $0xb0] sm:$0xff]
      %v1811 = vld [vmem:[#allocation3 + $0xb8] sm:$0xff]
      %v1812 = vld [vmem:[#allocation3 + $0xc0] sm:$0xff]
      %v1813 = vld [vmem:[#allocation3 + $0xc8] sm:$0xff]
      %v1814 = vld [vmem:[#allocation3 + $0xd0] sm:$0xff]
      %v1815 = vld [vmem:[#allocation3 + $0xd8] sm:$0xff]
      %v1816 = vld [vmem:[#allocation3 + $0xe0] sm:$0xff]
      %v1817 = vld [vmem:[#allocation3 + $0xe8] sm:$0xff]
      %v1818 = vld [vmem:[#allocation3 + $0xf0] sm:$0xff]
      %v1819 = vld [vmem:[#allocation3 + $0xf8] sm:$0xff]
      %v1820 = vld [vmem:[#allocation3 + $0x100] sm:$0xff]
      %v1821 = vld [vmem:[#allocation3 + $0x108] sm:$0xff]
      %v1822 = vld [vmem:[#allocation3 + $0x110] sm:$0xff]
      %v1823 = vld [vmem:[#allocation3 + $0x118] sm:$0xff]
      %v1824 = vld [vmem:[#allocation3 + $0x120] sm:$0xff]
      %v1825 = vld [vmem:[#allocation3 + $0x128] sm:$0xff]
      %v1826 = vld [vmem:[#allocation3 + $0x130] sm:$0xff]
      %v1827 = vld [vmem:[#allocation3 + $0x138] sm:$0xff]
      %v1828 = vld [vmem:[#allocation3 + $0x140] sm:$0xff]
      %v1829 = vld [vmem:[#allocation3 + $0x148] sm:$0xff]
      %v1830 = vld [vmem:[#allocation3 + $0x150] sm:$0xff]
      %v1831 = vld [vmem:[#allocation3 + $0x158] sm:$0xff]
      %v1832 = vld [vmem:[#allocation3 + $0x160] sm:$0xff]
      %v1833 = vld [vmem:[#allocation3 + $0x168] sm:$0xff]
      %v1834 = vld [vmem:[#allocation3 + $0x170] sm:$0xff]
      %v1835 = vld [vmem:[#allocation3 + $0x178] sm:$0xff]
      %v1836 = vld [vmem:[#allocation3 + $0x180] sm:$0xff]
      %v1837 = vld [vmem:[#allocation3 + $0x188] sm:$0xff]
      %v1838 = vld [vmem:[#allocation3 + $0x190] sm:$0xff]
      %v1839 = vld [vmem:[#allocation3 + $0x198] sm:$0xff]
      %v1840 = vld [vmem:[#allocation3 + $0x1a0] sm:$0xff]
      %v1841 = vld [vmem:[#allocation3 + $0x1a8] sm:$0xff]
      %v1842 = vld [vmem:[#allocation3 + $0x1b0] sm:$0xff]
      %v1843 = vld [vmem:[#allocation3 + $0x1b8] sm:$0xff]
      %v1844 = vld [vmem:[#allocation3 + $0x1c0] sm:$0xff]
      %v1845 = vld [vmem:[#allocation3 + $0x1c8] sm:$0xff]
      %v1846 = vld [vmem:[#allocation3 + $0x1d0] sm:$0xff]
      %v1847 = vld [vmem:[#allocation3 + $0x1d8] sm:$0xff]
      %v1848 = vld [vmem:[#allocation3 + $0x1e0] sm:$0xff]
      %v1849 = vld [vmem:[#allocation3 + $0x1e8] sm:$0xff]
      %v1850 = vld [vmem:[#allocation3 + $0x1f0] sm:$0xff]
      %v1851 = vld [vmem:[#allocation3 + $0x1f8] sm:$0xff]
      %1852 = vmatprep.subr.mxu0 %v1789
      %1853 = vmatpush1.msra.mxu0 %v1788
      %1854 = vmatprep.subr.mxu0 %v1791
      %1855 = vmatpush1.msra.mxu0 %v1790
      %1856 = vmatprep.subr.mxu0 %v1793
      %1857 = vmatpush1.msra.mxu0 %v1792
      %1858 = vmatprep.subr.mxu0 %v1795
      %1859 = vmatpush1.msra.mxu0 %v1794
      %1860 = vmatprep.subr.mxu0 %v1797
      %1861 = vmatpush1.msra.mxu0 %v1796
      %1862 = vmatprep.subr.mxu0 %v1799
      %1863 = vmatpush1.msra.mxu0 %v1798
      %1864 = vmatprep.subr.mxu0 %v1801
      %1865 = vmatpush1.msra.mxu0 %v1800
      %1866 = vmatprep.subr.mxu0 %v1803
      %1867 = vmatpush1.msra.mxu0 %v1802
      %1868 = vmatprep.subr.mxu0 %v1805
      %1869 = vmatpush1.msra.mxu0 %v1804
      %1870 = vmatprep.subr.mxu0 %v1807
      %1871 = vmatpush1.msra.mxu0 %v1806
      %1872 = vmatprep.subr.mxu0 %v1809
      %1873 = vmatpush1.msra.mxu0 %v1808
      %1874 = vmatprep.subr.mxu0 %v1811
      %1875 = vmatpush1.msra.mxu0 %v1810
      %1876 = vmatprep.subr.mxu0 %v1813
      %1877 = vmatpush1.msra.mxu0 %v1812
      %1878 = vmatprep.subr.mxu0 %v1815
      %1879 = vmatpush1.msra.mxu0 %v1814
      %1880 = vmatprep.subr.mxu0 %v1817
      %1881 = vmatpush1.msra.mxu0 %v1816
      %1882 = vmatprep.subr.mxu0 %v1819
      %1883 = vmatpush1.msra.mxu0 %v1818
      %1884 = vmatprep.subr.mxu0 %v1821
      %1885 = vmatpush1.msra.mxu0 %v1820
      %1886 = vmatprep.subr.mxu0 %v1823
      %1887 = vmatpush1.msra.mxu0 %v1822
      %1888 = vmatprep.subr.mxu0 %v1825
      %1889 = vmatpush1.msra.mxu0 %v1824
      %1890 = vmatprep.subr.mxu0 %v1827
      %1891 = vmatpush1.msra.mxu0 %v1826
      %1892 = vmatprep.subr.mxu0 %v1829
      %1893 = vmatpush1.msra.mxu0 %v1828
      %1894 = vmatprep.subr.mxu0 %v1831
      %1895 = vmatpush1.msra.mxu0 %v1830
      %1896 = vmatprep.subr.mxu0 %v1833
      %1897 = vmatpush1.msra.mxu0 %v1832
      %1898 = vmatprep.subr.mxu0 %v1835
      %1899 = vmatpush1.msra.mxu0 %v1834
      %1900 = vmatprep.subr.mxu0 %v1837
      %1901 = vmatpush1.msra.mxu0 %v1836
      %1902 = vmatprep.subr.mxu0 %v1839
      %1903 = vmatpush1.msra.mxu0 %v1838
      %1904 = vmatprep.subr.mxu0 %v1841
      %1905 = vmatpush1.msra.mxu0 %v1840
      %1906 = vmatprep.subr.mxu0 %v1843
      %1907 = vmatpush1.msra.mxu0 %v1842
      %1908 = vmatprep.subr.mxu0 %v1845
      %1909 = vmatpush1.msra.mxu0 %v1844
      %1910 = vmatprep.subr.mxu0 %v1847
      %1911 = vmatpush1.msra.mxu0 %v1846
      %1912 = vmatprep.subr.mxu0 %v1849
      %1913 = vmatpush1.msra.mxu0 %v1848
      %1914 = vmatprep.subr.mxu0 %v1851
      %1915 = vmatpush1.msra.mxu0 %v1850
      %1916 = vmatprep.mubr.f32.mxu0 %v1787
      %1917 = vmatmul.mubr.f32.gmra.mrb[0].mxu0 %v1786
      %v1918 = vpop.f32.mrb[0].mxu0
      %v1919 = vadd.f32 0.0, %v1918
      %v1920 = vpop.f32.mrb[0].mxu0
      %v1921 = vadd.f32 0.0, %v1920
      %1922 = vdwg.mxu0
      %v1923 = vadd.f32 %v1919, %v1921
      %1924 = vadd.xlane.f32.xlu0 %v1923
      %v1925 = vpop.xlane.xlu0 %1924
      %v1926 = vmul.f32 %v1925, %v1224
      %v1927 = vsub.f32 %v1919, %v1926
      %v1928 = vsub.f32 %v1921, %v1926
      %v1929 = vmul.f32 %v1927, %v1927
      %v1930 = vmul.f32 %v1928, %v1928
      %v1931 = vadd.f32 %v1929, %v1930
      %1932 = vadd.xlane.f32.xlu0 %v1931
      %v1933 = vpop.xlane.xlu0 %1932
      %v1934 = vmul.f32 %v1933, %v1224
      %v1935 = vadd.f32 %v1934, 1e-05
      %v1936 = vrsqrt.pop %v1935
      %v1937 = vmul.f32 %v1927, %v1936
      %v1938 = vmul.f32 %v1928, %v1936
      %v1939 = vld [vmem:[%s4] sm:$0xff]
      %vm1940 = vcmask 31744
      %v1942 = vsel %vm1940, %v1939, 0
      %v1944 = vsel %vm381, %v312, 0
      %v1946 = vsel %vm381, %v314, 0
      %1948 = vmatprep.subr.mxu0 %v1946
      %1949 = vmatpush1.msra.mxu0 %v1944
      %1950 = vmatprep.subr.mxu0 0.0
      %1951 = vmatpush1.msra.mxu0 0.0
      %1952 = vmatprep.subr.mxu0 0.0
      %1953 = vmatpush1.msra.mxu0 0.0
      %1954 = vmatprep.subr.mxu0 0.0
      %1955 = vmatpush1.msra.mxu0 0.0
      %1956 = vmatprep.subr.mxu0 0.0
      %1957 = vmatpush1.msra.mxu0 0.0
      %1958 = vmatprep.subr.mxu0 0.0
      %1959 = vmatpush1.msra.mxu0 0.0
      %1960 = vmatprep.subr.mxu0 0.0
      %1961 = vmatpush1.msra.mxu0 0.0
      %1962 = vmatprep.subr.mxu0 0.0
      %1963 = vmatpush1.msra.mxu0 0.0
      %1964 = vmatprep.subr.mxu0 0.0
      %1965 = vmatpush1.msra.mxu0 0.0
      %1966 = vmatprep.subr.mxu0 0.0
      %1967 = vmatpush1.msra.mxu0 0.0
      %1968 = vmatprep.subr.mxu0 0.0
      %1969 = vmatpush1.msra.mxu0 0.0
      %1970 = vmatprep.subr.mxu0 0.0
      %1971 = vmatpush1.msra.mxu0 0.0
      %1972 = vmatprep.subr.mxu0 0.0
      %1973 = vmatpush1.msra.mxu0 0.0
      %1974 = vmatprep.subr.mxu0 0.0
      %1975 = vmatpush1.msra.mxu0 0.0
      %1976 = vmatprep.subr.mxu0 0.0
      %1977 = vmatpush1.msra.mxu0 0.0
      %1978 = vmatprep.subr.mxu0 0.0
      %1979 = vmatpush1.msra.mxu0 0.0
      %1980 = vmatprep.subr.mxu0 0.0
      %1981 = vmatpush1.msra.mxu0 0.0
      %1982 = vmatprep.subr.mxu0 0.0
      %1983 = vmatpush1.msra.mxu0 0.0
      %1984 = vmatprep.subr.mxu0 0.0
      %1985 = vmatpush1.msra.mxu0 0.0
      %1986 = vmatprep.subr.mxu0 0.0
      %1987 = vmatpush1.msra.mxu0 0.0
      %1988 = vmatprep.subr.mxu0 0.0
      %1989 = vmatpush1.msra.mxu0 0.0
      %1990 = vmatprep.subr.mxu0 0.0
      %1991 = vmatpush1.msra.mxu0 0.0
      %1992 = vmatprep.subr.mxu0 0.0
      %1993 = vmatpush1.msra.mxu0 0.0
      %1994 = vmatprep.subr.mxu0 0.0
      %1995 = vmatpush1.msra.mxu0 0.0
      %1996 = vmatprep.subr.mxu0 0.0
      %1997 = vmatpush1.msra.mxu0 0.0
      %1998 = vmatprep.subr.mxu0 0.0
      %1999 = vmatpush1.msra.mxu0 0.0
      %2000 = vmatprep.subr.mxu0 0.0
      %2001 = vmatpush1.msra.mxu0 0.0
      %2002 = vmatprep.subr.mxu0 0.0
      %2003 = vmatpush1.msra.mxu0 0.0
      %2004 = vmatprep.subr.mxu0 0.0
      %2005 = vmatpush1.msra.mxu0 0.0
      %2006 = vmatprep.subr.mxu0 0.0
      %2007 = vmatpush1.msra.mxu0 0.0
      %2008 = vmatprep.subr.mxu0 0.0
      %2009 = vmatpush1.msra.mxu0 0.0
      %2010 = vmatprep.subr.mxu0 0.0
      %2011 = vmatpush1.msra.mxu0 0.0
      %2012 = vmatprep.mubr.f32.mxu0 0.0
      %2013 = vmatmul.mubr.f32.gmra.mrb[0].mxu0 %v1942
      %v2014 = vpop.f32.mrb[0].mxu0
      %v2015 = vadd.f32 0.0, %v2014
      %v2016 = vpop.f32.mrb[0].mxu0
      %v2017 = vadd.f32 0.0, %v2016
      %2018 = vdwg.mxu0
      %v2019 = vadd.f32 %v2015, %v2017
      %2020 = vadd.xlane.f32.xlu0 %v2019
      %v2021 = vpop.xlane.xlu0 %2020
      %v2022 = vmul.f32 %v2021, %v1224
      %v2023 = vsub.f32 %v2015, %v2022
      %v2024 = vsub.f32 %v2017, %v2022
      %v2025 = vmul.f32 %v2023, %v2023
      %v2026 = vmul.f32 %v2024, %v2024
      %v2027 = vadd.f32 %v2025, %v2026
      %2028 = vadd.xlane.f32.xlu0 %v2027
      %v2029 = vpop.xlane.xlu0 %2028
      %v2030 = vmul.f32 %v2029, %v1224
      %v2031 = vadd.f32 %v2030, 1e-05
      %v2032 = vrsqrt.pop %v2031
      %v2033 = vmul.f32 %v2023, %v2032
      %v2034 = vmul.f32 %v2024, %v2032
      %v2035 = vadd.f32 %v1937, %v2033
      %v2036 = vadd.f32 %v1938, %v2034
      %v2037 = vmax.f32 %v2035, 0.0
      %v2038 = vmax.f32 %v2036, 0.0
      %2039 = vst [vmem:[%s224] sm:$0xff] %v2037
      %2040 = vst [vmem:[%s224 + $0x8] sm:$0xff] %v2038
      %p2041 = scmp.lt.s32.totalorder %s16, 1
      %s2042 = scalar_select %p2041, %s16, 1
      %s2043 = smul.addr %s2042, 2
      %s2044 = smul.addr %s2043, 8
      %s2045 = scalar_lea.vmem %s5, %s2044
      // Predicated region
      $region45: #{channel_compression_forward.1} parent=39 // pred_check
        %p2046 = pneg %p144
      $region46: #{channel_compression_forward.1} parent=39 // pred_check_branch
        %2048 = sbr.rel (%p2046) target = $region48
      $region47: #{channel_compression_forward.1} parent=39 // pred_region
        _
      $region48: #{channel_compression_forward.1} parent=39 // pred_fallthru
        _
    $region40: #{channel_compression_forward.1} parent=5 // pred_fallthru
      _
    %p2049 = scmp.le.s32.totalorder 2, %s11
    // Predicated region
    $region49: #{channel_compression_forward.1} parent=5 // pred_check
      %p2050 = pneg %p2049
    $region50: #{channel_compression_forward.1} parent=5 // pred_check_branch
      %2052 = sbr.rel (%p2050) target = $region52
    $region51: #{channel_compression_forward.1} parent=5 // pred_region
      %s2053 = ssub.s32 %s11, 2
      // Predicated region
      $region53: #{channel_compression_forward.1} parent=51 // pred_check
        %p2054 = pneg %p150
      $region54: #{channel_compression_forward.1} parent=51 // pred_check_branch
        %2056 = sbr.rel (%p2054) target = $region56
      $region55: #{channel_compression_forward.1} parent=51 // pred_region
        %p2057 = scmp.lt.s32.totalorder %s17, 1
        %s2058 = scalar_select %p2057, %s17, 1
        %s2059 = smul.addr %s2058, 2
        %s2060 = smul.addr %s2059, 8
        %s2061 = scalar_lea.vmem %s5, %s2060
      $region56: #{channel_compression_forward.1} parent=51 // pred_fallthru
        _
    $region52: #{channel_compression_forward.1} parent=5 // pred_fallthru
      _
  $region6: #{channel_compression_forward.1} parent=0 // loop_footer
    %s15 = sadd.s32 1, %s11
  $region7: #{channel_compression_forward.1} parent=0 // loop_footer_branch
    %10 = sbr.rel target = $region3
  $region8: #{channel_compression_forward.1} parent=0 // loop_exit
    _

</llo_original>
